<compile_context>
chip_gen: v6e
topology: v6e:2x2x1
jax: 0.10.0
libtpu: 0.0.40
codegen_flags: <defaults>
</compile_context>

<pallas_src>
import math
from functools import partial

import numpy as np
import jax
import jax.numpy as jnp
from jax import lax
from jax.experimental import pallas as pl
from jax.experimental.pallas import tpu as pltpu


def _round_up(n, m):
    return (n + m - 1) // m * m


def _taylor_alphas(order, gamma=1e-4):
    """alpha_o = sqrt((2*gamma)^o / o! * exp(-2*gamma)) -- static Python floats."""
    beta = math.exp(-2.0 * gamma)
    return tuple(
        math.sqrt(((2.0 * gamma) ** o) / math.factorial(o) * beta)
        for o in range(order + 1)
    )


def _taylor_coefs(order, gc, hw, use_scale, gamma=1e-4):
    """coef_o = alpha_o^2 [* 1/sqrt(gc*hw) if use_scale] as static Python floats.

    The module applies alpha_o once on p^o (inside the attention inner product)
    and once on t^o; both factors plus the optional scale are folded here so the
    kernel does a single static-scalar multiply per order.
    NOTE: this changes the order of tiny-constant application vs. the reference
    (raw f32 sum of p^o*g first, alpha^2 after); fine at realistic activation
    scales, documented per review.
    """
    beta = math.exp(-2.0 * gamma)
    scale = 1.0 / math.sqrt(gc * hw) if use_scale else 1.0
    return tuple(
        ((2.0 * gamma) ** o) / math.factorial(o) * beta * scale
        for o in range(order + 1)
    )


def _cgnlx_kernel(x_ref, wtpg_ref, wz_ref, ey_ref, eyt_ref, ez_ref, ezt_ref,
                  gamma_ref, beta_ref, out_ref, *,
                  planes_blk_pad, cin_blk, n_gblk, order, coefs, eps,
                  inv_gn_count, hw_valid, mm_dtype):
    f32 = jnp.float32
    is_f32_mm = jnp.dtype(mm_dtype) == jnp.dtype(jnp.float32)

    xb = x_ref[0]                                    # (cin, hw_pad) f32
    xmm = xb if is_f32_mm else xb.astype(mm_dtype)

    # -- theta / phi / g for this group-block: ONE fused MXU matmul ------------
    tpg = jnp.dot(wtpg_ref[0], xmm, preferred_element_type=f32)
    t = tpg[0 * planes_blk_pad:1 * planes_blk_pad, :]   # 8-sublane-aligned slices
    p = tpg[1 * planes_blk_pad:2 * planes_blk_pad, :]
    g = tpg[2 * planes_blk_pad:3 * planes_blk_pad, :]

    # -- Taylor-expanded Gaussian-RBF attention --------------------------------
    # Per-(row, order) hw reductions via running powers of p, then the group
    # reduce / broadcast-back done as ONE (gb x planes) and ONE (planes x gb)
    # matmul over the stacked (planes_blk_pad, order+1) matrix (was 2*(order+1)
    # lane-sparse N=1 matmuls).
    row_sums = [jnp.sum(g, axis=1, keepdims=True)]                  # o = 0 term
    p_pow = p
    for o in range(1, order + 1):
        if o > 1:
            p_pow = p_pow * p
        row_sums.append(jnp.sum(p_pow * g, axis=1, keepdims=True))
    rs = jnp.concatenate(row_sums, axis=1)                          # (planes_blk_pad, order+1)
    grp = jnp.dot(eyt_ref[...], rs, preferred_element_type=f32)     # (gb, order+1)
    att = jnp.dot(ey_ref[...], grp, preferred_element_type=f32)     # (planes_blk_pad, order+1)

    # y = sum_o coef_o * att[:, o] * t^o   (running powers of t; coef_o static)
    att0 = coefs[0] * att[:, 0:1]
    if hw_valid is not None:
        # hw was lane-padded: mask the o=0 (constant) term so padded columns of
        # y, z and the GroupNorm sums are exactly zero.  Same cost as the
        # broadcast it replaces.
        lane = lax.broadcasted_iota(jnp.int32, (1, t.shape[1]), 1)
        y = att0 * (lane < hw_valid).astype(f32)
    else:
        y = jnp.broadcast_to(att0, t.shape)
    t_pow = t
    for o in range(1, order + 1):
        if o > 1:
            t_pow = t_pow * t
        y = y + (coefs[o] * att[:, o:o + 1]) * t_pow

    # -- grouped 1x1 conv `z`: single block-diagonal matmul for this block -----
    ymm = y if is_f32_mm else y.astype(mm_dtype)
    z = jnp.dot(wz_ref[0], ymm, preferred_element_type=f32)         # (cin_blk, hw_pad)

    # -- GroupNorm: single-pass sums + batched group matmuls -------------------
    stats = jnp.concatenate(
        [jnp.sum(z, axis=1, keepdims=True),
         jnp.sum(z * z, axis=1, keepdims=True)], axis=1)            # (cin_blk, 2)
    gstats = jnp.dot(ezt_ref[...], stats, preferred_element_type=f32)   # (gb, 2)
    gmean = gstats[:, 0:1] * inv_gn_count
    gvar = jnp.maximum(gstats[:, 1:2] * inv_gn_count - gmean * gmean, 0.0)
    grstd = lax.rsqrt(gvar + eps)
    rows = jnp.dot(ez_ref[...], jnp.concatenate([gmean, grstd], axis=1),
                   preferred_element_type=f32)                      # (cin_blk, 2)
    mean_rows = rows[:, 0:1]
    rstd_rows = rows[:, 1:2]

    # Fold the GN affine into one per-row scale + bias, then one FMA epilogue.
    a_rows = rstd_rows * gamma_ref[0]                               # (cin_blk, 1)
    b_rows = beta_ref[0] - mean_rows * a_rows

    if n_gblk == 1:
        x_res = xb
    else:
        row0 = pl.multiple_of(pl.program_id(1) * cin_blk, 8)
        x_res = x_ref[0, pl.ds(row0, cin_blk), :]

    # single full-block (cin_blk, hw_pad) store -- lane-dense, no masked writebacks
    out_ref[0] = z * a_rows + b_rows + x_res


def _chip_vmem_bytes():
    try:
        info = pltpu.get_tpu_info()
        cap = getattr(info, "vmem_capacity_bytes", None)
        if cap:
            return int(cap)
    except Exception:
        pass
    return 64 * 1024 * 1024        # conservative default (v7x per-TensorCore)


def _estimate_vmem(cin, hw_pad, planes_blk_pad, cin_blk, mm_bytes, n_gblk):
    f32b = 4
    # x + out blocks, double-buffered by the pipeline
    io = 2 * cin * hw_pad * f32b + 2 * cin_blk * hw_pad * f32b
    # weights / GN affine (single copy when single-buffered constants apply)
    wcopies = 1 if n_gblk == 1 else 2
    wts = wcopies * ((3 * planes_blk_pad * cin + cin_blk * planes_blk_pad) * mm_bytes
                     + 2 * cin_blk * f32b)
    # tpg + t/p/g slices + running powers + y  (f32)  +  z / epilogue temps
    inter = (9 * planes_blk_pad * hw_pad + 2 * cin_blk * hw_pad) * f32b
    if mm_bytes < 4:
        inter += (cin + planes_blk_pad) * hw_pad * mm_bytes        # bf16 cast copies of x, y
    return io + wts + inter + (2 << 20)


def _pick_group_blocks(groups, cin, planes, hw_pad, mm_bytes, budget):
    """Smallest number of group blocks whose estimated footprint fits `budget`."""
    gc = planes // groups
    cg_out = cin // groups
    best = None
    for d in range(1, groups + 1):
        if groups % d:
            continue
        gb = groups // d
        cin_blk = gb * cg_out
        if d > 1 and cin_blk % 8:      # output block / residual slice must be 8-aligned
            continue
        est = _estimate_vmem(cin, hw_pad, _round_up(gb * gc, 8), cin_blk, mm_bytes, d)
        if est <= budget:
            return d, est
        if best is None or est < best[1]:
            best = (d, est)
    return best


def spatial_cgnlx_forward(x_nchw, wt, wp, wg, wz, gn_weight, gn_bias, *,
                          groups=8, order=3, use_scale=False, eps=1e-5,
                          matmul_dtype=jnp.bfloat16, group_blocks=None):
    """Forward pass of SpatialCGNLx.

    x_nchw: (B, C_in, H, W) f32.  wt/wp/wg: (planes, C_in) 1x1-conv weights,
    wz: (C_in, planes//groups) grouped 1x1-conv weight, gn_weight/gn_bias: (C_in,).
    matmul_dtype defaults to bfloat16 on all TPU generations (the MXU is
    bf16-native on v5e as well); all Taylor / GroupNorm elementwise math stays
    f32.  Pass matmul_dtype=jnp.float32 for bit-accurate checks.
    """
    b, cin, h, w = x_nchw.shape
    hw = h * w
    hw_pad = _round_up(hw, 128)
    planes = wt.shape[0]
    assert planes % groups == 0 and cin % groups == 0
    gc = planes // groups          # t/p/g channels per attention group
    cg_out = cin // groups         # z-conv / GroupNorm channels per group
    mm_bytes = jnp.dtype(matmul_dtype).itemsize

    chip_vmem = _chip_vmem_bytes()
    budget = chip_vmem - (8 << 20)

    if group_blocks is None:
        n_gblk, est = _pick_group_blocks(groups, cin, planes, hw_pad, mm_bytes, budget)
    else:
        n_gblk = int(group_blocks)
        assert groups % n_gblk == 0
        gb_ = groups // n_gblk
        assert n_gblk == 1 or (gb_ * cg_out) % 8 == 0, \
            "per-group-block channel count must be a multiple of 8"
        est = _estimate_vmem(cin, hw_pad, _round_up(gb_ * gc, 8), gb_ * cg_out,
                             mm_bytes, n_gblk)
    gb = groups // n_gblk
    planes_blk = gb * gc
    planes_blk_pad = _round_up(planes_blk, 8)
    cin_blk = gb * cg_out

    # ---- host-side packing (pure glue, outside the kernel) -------------------
    x = x_nchw.reshape(b, cin, hw).astype(jnp.float32)
    if hw_pad != hw:
        x = jnp.pad(x, ((0, 0), (0, 0), (0, hw_pad - hw)))

    wt_np = np.asarray(wt, np.float32)
    wp_np = np.asarray(wp, np.float32)
    wg_np = np.asarray(wg, np.float32)
    wz_np = np.asarray(wz, np.float32)

    # Per-group-block stacked theta/phi/g weights and block-diagonal z weights.
    w_tpg = np.zeros((n_gblk, 3 * planes_blk_pad, cin), np.float32)
    wz_bd = np.zeros((n_gblk, cin_blk, planes_blk_pad), np.float32)
    for j in range(n_gblk):
        sl = slice(j * planes_blk, (j + 1) * planes_blk)
        w_tpg[j, 0 * planes_blk_pad:0 * planes_blk_pad + planes_blk] = wt_np[sl]
        w_tpg[j, 1 * planes_blk_pad:1 * planes_blk_pad + planes_blk] = wp_np[sl]
        w_tpg[j, 2 * planes_blk_pad:2 * planes_blk_pad + planes_blk] = wg_np[sl]
        for l in range(gb):
            gi = j * gb + l
            wz_bd[j, l * cg_out:(l + 1) * cg_out, l * gc:(l + 1) * gc] = \
                wz_np[gi * cg_out:(gi + 1) * cg_out, :]
    w_tpg = jnp.asarray(w_tpg).astype(matmul_dtype)
    wz_bd = jnp.asarray(wz_bd).astype(matmul_dtype)

    # One-hot group-membership matrices (identical across group blocks).
    ry = np.arange(planes_blk_pad)
    e_y_np = (((ry[:, None] // gc) == np.arange(gb)[None, :])
              & (ry[:, None] < planes_blk)).astype(np.float32)      # (planes_blk_pad, gb)
    rz = np.arange(cin_blk)
    e_z_np = ((rz[:, None] // cg_out) ==
              np.arange(gb)[None, :]).astype(np.float32)            # (cin_blk, gb)
    e_y, e_yt = jnp.asarray(e_y_np), jnp.asarray(np.ascontiguousarray(e_y_np.T))
    e_z, e_zt = jnp.asarray(e_z_np), jnp.asarray(np.ascontiguousarray(e_z_np.T))

    gamma = jnp.asarray(gn_weight, jnp.float32).reshape(n_gblk, cin_blk, 1)
    beta = jnp.asarray(gn_bias, jnp.float32).reshape(n_gblk, cin_blk, 1)

    coefs = _taylor_coefs(order, gc, hw, use_scale)
    inv_gn_count = 1.0 / float(cg_out * hw)

    kernel = partial(_cgnlx_kernel, planes_blk_pad=planes_blk_pad,
                     cin_blk=cin_blk, n_gblk=n_gblk, order=order, coefs=coefs,
                     eps=eps, inv_gn_count=inv_gn_count,
                     hw_valid=(hw if hw_pad != hw else None),
                     mm_dtype=matmul_dtype)

    # Explicit VMEM budget, clamped to the physical chip capacity (minus headroom).
    vmem_limit = int(max(32 << 20, min(budget, int(1.25 * est) + (4 << 20))))

    def build(buffered_constants):
        # Single-buffer the grid-invariant operands (E matrices always; weights /
        # GN affine only when their index map is constant, i.e. n_gblk == 1).
        cpipe = {"pipeline_mode": pl.Buffered(1)} if buffered_constants else {}
        wpipe = cpipe if n_gblk == 1 else {}
        grid_spec = pltpu.PrefetchScalarGridSpec(
            num_scalar_prefetch=0,
            grid=(b, n_gblk),
            in_specs=[
                # x: full channels per batch; index_map constant over the group
                # axis so the DMA is not re-issued within a batch.
                pl.BlockSpec((1, cin, hw_pad), lambda i, j: (i, 0, 0)),
                pl.BlockSpec((1, 3 * planes_blk_pad, cin), lambda i, j: (j, 0, 0), **wpipe),
                pl.BlockSpec((1, cin_blk, planes_blk_pad), lambda i, j: (j, 0, 0), **wpipe),
                pl.BlockSpec((planes_blk_pad, gb), lambda i, j: (0, 0), **cpipe),
                pl.BlockSpec((gb, planes_blk_pad), lambda i, j: (0, 0), **cpipe),
                pl.BlockSpec((cin_blk, gb), lambda i, j: (0, 0), **cpipe),
                pl.BlockSpec((gb, cin_blk), lambda i, j: (0, 0), **cpipe),
                pl.BlockSpec((1, cin_blk, 1), lambda i, j: (j, 0, 0), **wpipe),
                pl.BlockSpec((1, cin_blk, 1), lambda i, j: (j, 0, 0), **wpipe),
            ],
            out_specs=pl.BlockSpec((1, cin_blk, hw_pad), lambda i, j: (i, j, 0)),
        )
        return pl.pallas_call(
            kernel,
            out_shape=jax.ShapeDtypeStruct((b, cin, hw_pad), jnp.float32),
            grid_spec=grid_spec,
            compiler_params=pltpu.CompilerParams(
                dimension_semantics=("parallel", "parallel"),
                vmem_limit_bytes=vmem_limit),
        )

    args = (x, w_tpg, wz_bd, e_y, e_yt, e_z, e_zt, gamma, beta)
    try:
        out = build(True)(*args)
    except Exception:
        # pipeline_mode=pl.Buffered(1) unsupported on this jax build: fall back
        # to default double-buffered constants (correctness identical).
        out = build(False)(*args)

    if hw_pad != hw:
        out = out[:, :, :hw]
    return out.reshape(b, cin, h, w)


def _reference_forward(x, wt, wp, wg, wz, gn_w, gn_b, *, groups, order,
                       use_scale=False, eps=1e-5):
    """Pure-JAX reference mirroring the PyTorch module semantics."""
    b, cin, h, w = x.shape
    hw = h * w
    planes = wt.shape[0]
    gc = planes // groups
    cg_out = cin // groups
    alphas = _taylor_alphas(order)
    hp = jax.lax.Precision.HIGHEST

    xf = x.reshape(b, cin, hw)
    t = jnp.einsum('oc,bcn->bon', wt, xf, precision=hp)
    p = jnp.einsum('oc,bcn->bon', wp, xf, precision=hp)
    g = jnp.einsum('oc,bcn->bon', wg, xf, precision=hp)

    ys = []
    for gi in range(groups):
        tg = t[:, gi * gc:(gi + 1) * gc].reshape(b, gc * hw)
        pg = p[:, gi * gc:(gi + 1) * gc].reshape(b, gc * hw)
        gg = g[:, gi * gc:(gi + 1) * gc].reshape(b, gc * hw)
        y = jnp.zeros_like(tg)
        for o in range(order + 1):
            att = alphas[o] * jnp.sum((pg ** o) * gg, axis=-1, keepdims=True)
            if use_scale:
                att = att / ((gc * hw) ** 0.5)
            y = y + (att * alphas[o]) * (tg ** o)
        ys.append(y.reshape(b, gc, hw))
    y = jnp.concatenate(ys, axis=1)

    zs = []
    for gi in range(groups):
        zs.append(jnp.einsum('oc,bcn->bon',
                             wz[gi * cg_out:(gi + 1) * cg_out],
                             y[:, gi * gc:(gi + 1) * gc], precision=hp))
    z = jnp.concatenate(zs, axis=1)

    zg = z.reshape(b, groups, cg_out * hw)
    mean = zg.mean(-1, keepdims=True)
    var = ((zg - mean) ** 2).mean(-1, keepdims=True)
    zn = ((zg - mean) / jnp.sqrt(var + eps)).reshape(b, cin, hw)
    out = zn * gn_w[None, :, None] + gn_b[None, :, None] + xf
    return out.reshape(b, cin, h, w)


if __name__ == "__main__":
    # Small, module-consistent shapes: inplanes=16 -> planes=8, groups=4, order=3.
    groups, order = 4, 3
    b, cin, h, w = 2, 16, 16, 16
    planes = cin // 2

    key = jax.random.PRNGKey(0)
    k = jax.random.split(key, 6)
    x = jax.random.normal(k[0], (b, cin, h, w), jnp.float32)
    x2 = jax.random.normal(k[5], (b, cin, 12, 12), jnp.float32)   # hw=144, not lane-aligned

    # Conv weights ~ N(0, 0.01), matching _init_nl. No biases (bias=False).
    wt = 0.01 * jax.random.normal(k[1], (planes, cin), jnp.float32)
    wp = 0.01 * jax.random.normal(k[2], (planes, cin), jnp.float32)
    wg = 0.01 * jax.random.normal(k[3], (planes, cin), jnp.float32)
    wz = 0.01 * jax.random.normal(k[4], (cin, planes // groups), jnp.float32)
    # GroupNorm affine at PyTorch defaults (weight=1, bias=0) to keep the test
    # non-trivial.  TODO(synk): _init_nl zeroes the GN affine, which would make
    # the block output exactly equal the residual.
    gn_w = jnp.ones((cin,), jnp.float32)
    gn_b = jnp.zeros((cin,), jnp.float32)

    # 1) f32 matmuls, lane-aligned hw (16x16=256), auto group blocking: strict check.
    ref = _reference_forward(x, wt, wp, wg, wz, gn_w, gn_b,
                             groups=groups, order=order, use_scale=False)
    out = spatial_cgnlx_forward(x, wt, wp, wg, wz, gn_w, gn_b,
                                groups=groups, order=order, use_scale=False,
                                matmul_dtype=jnp.float32)
    out = jax.block_until_ready(out)
    assert out.shape == x.shape
    err = float(jnp.max(jnp.abs(out - ref)))
    assert jnp.allclose(out, ref, rtol=1e-3, atol=5e-4), err

    # 2) Non-128-multiple hw (12x12=144 -> padded to 256) + forced 2 group blocks
    #    + use_scale: exercises lane padding/masking, the group-block grid axis
    #    and the dynamic residual slice.  Strict check.
    ref2 = _reference_forward(x2, wt, wp, wg, wz, gn_w, gn_b,
                              groups=groups, order=order, use_scale=True)
    out2 = spatial_cgnlx_forward(x2, wt, wp, wg, wz, gn_w, gn_b,
                                 groups=groups, order=order, use_scale=True,
                                 matmul_dtype=jnp.float32, group_blocks=2)
    out2 = jax.block_until_ready(out2)
    assert out2.shape == x2.shape
    err2 = float(jnp.max(jnp.abs(out2 - ref2)))
    assert jnp.allclose(out2, ref2, rtol=1e-3, atol=5e-4), err2

    # 3) bf16 matmul operands (the default on all chips): loose sanity check only;
    #    bf16 operand rounding vs. the Precision.HIGHEST f32 reference drifts
    #    beyond the strict tolerance by design (higher-order Taylor terms are
    #    near rounding noise in bf16 -- acceptable for inference).
    out_bf16 = spatial_cgnlx_forward(x, wt, wp, wg, wz, gn_w, gn_b,
                                     groups=groups, order=order, use_scale=False)
    out_bf16 = jax.block_until_ready(out_bf16)
    assert out_bf16.shape == x.shape
    assert bool(jnp.all(jnp.isfinite(out_bf16)))
    assert jnp.allclose(out_bf16, ref, rtol=1e-1, atol=1e-1)

    print("KERNEL_OK")
</pallas_src>

<mosaic_0001>
module attributes {stable_mosaic.version = 11 : i64} {
  func.func @_cgnlx_kernel(%arg0: i32, %arg1: i32, %arg2: memref<1x16x256xf32, #tpu.memory_space<vmem>>, %arg3: memref<1x24x16xf32, #tpu.memory_space<vmem>>, %arg4: memref<1x16x8xf32, #tpu.memory_space<vmem>>, %arg5: memref<8x4xf32, #tpu.memory_space<vmem>>, %arg6: memref<4x8xf32, #tpu.memory_space<vmem>>, %arg7: memref<16x4xf32, #tpu.memory_space<vmem>>, %arg8: memref<4x16xf32, #tpu.memory_space<vmem>>, %arg9: memref<1x16x1xf32, #tpu.memory_space<vmem>>, %arg10: memref<1x16x1xf32, #tpu.memory_space<vmem>>, %arg11: memref<1x16x256xf32, #tpu.memory_space<vmem>>) attributes {dimension_semantics = [#tpu.dimension_semantics<parallel>, #tpu.dimension_semantics<parallel>], iteration_bounds = array<i64: 2, 1>, scalar_prefetch = 0 : i64, scratch_operands = 0 : i64, tpu.core_type = #tpu.core_type<tc>, window_params = [{transform_indices = @transform_0, window_bounds = array<i64: 1, 16, 256>}, {pipeline_mode = #tpu.pipeline_mode<synchronous>, transform_indices = @transform_1, window_bounds = array<i64: 1, 24, 16>}, {pipeline_mode = #tpu.pipeline_mode<synchronous>, transform_indices = @transform_2, window_bounds = array<i64: 1, 16, 8>}, {pipeline_mode = #tpu.pipeline_mode<synchronous>, transform_indices = @transform_3, window_bounds = array<i64: 8, 4>}, {pipeline_mode = #tpu.pipeline_mode<synchronous>, transform_indices = @transform_4, window_bounds = array<i64: 4, 8>}, {pipeline_mode = #tpu.pipeline_mode<synchronous>, transform_indices = @transform_5, window_bounds = array<i64: 16, 4>}, {pipeline_mode = #tpu.pipeline_mode<synchronous>, transform_indices = @transform_6, window_bounds = array<i64: 4, 16>}, {pipeline_mode = #tpu.pipeline_mode<synchronous>, transform_indices = @transform_7, window_bounds = array<i64: 1, 16, 1>}, {pipeline_mode = #tpu.pipeline_mode<synchronous>, transform_indices = @transform_8, window_bounds = array<i64: 1, 16, 1>}, {transform_indices = @transform_9, window_bounds = array<i64: 1, 16, 256>}]} {
    %c0 = arith.constant 0 : index
    %c0_0 = arith.constant 0 : index
    %c0_1 = arith.constant 0 : index
    %0 = vector.load %arg2[%c0, %c0_0, %c0_1] : memref<1x16x256xf32, #tpu.memory_space<vmem>>, vector<1x16x256xf32>
    %1 = vector.shape_cast %0 : vector<1x16x256xf32> to vector<16x256xf32>
    %c0_2 = arith.constant 0 : index
    %c0_3 = arith.constant 0 : index
    %c0_4 = arith.constant 0 : index
    %2 = vector.load %arg3[%c0_2, %c0_3, %c0_4] : memref<1x24x16xf32, #tpu.memory_space<vmem>>, vector<1x24x16xf32>
    %3 = vector.shape_cast %2 : vector<1x24x16xf32> to vector<24x16xf32>
    %cst = arith.constant dense<0.000000e+00> : vector<24x256xf32>
    %4 = tpu.matmul %3, %1, %cst {dimension_numbers = #tpu.dot_dimension_numbers<[1], [0], [0], [1], [0, 0, 1, 1], [], []>} : vector<24x16xf32>, vector<16x256xf32>, vector<24x256xf32> -> vector<24x256xf32>
    %5 = vector.extract_strided_slice %4 {offsets = [0, 0], sizes = [8, 256], strides = [1, 1]} : vector<24x256xf32> to vector<8x256xf32>
    %6 = vector.extract_strided_slice %4 {offsets = [8, 0], sizes = [8, 256], strides = [1, 1]} : vector<24x256xf32> to vector<8x256xf32>
    %7 = vector.extract_strided_slice %4 {offsets = [16, 0], sizes = [8, 256], strides = [1, 1]} : vector<24x256xf32> to vector<8x256xf32>
    %cst_5 = arith.constant dense<0.000000e+00> : vector<8xf32>
    %8 = vector.multi_reduction <add>, %7, %cst_5 [1] : vector<8x256xf32> to vector<8xf32>
    %9 = vector.shape_cast %8 : vector<8xf32> to vector<8x1xf32>
    %10 = arith.mulf %6, %7 : vector<8x256xf32>
    %cst_6 = arith.constant dense<0.000000e+00> : vector<8xf32>
    %11 = vector.multi_reduction <add>, %10, %cst_6 [1] : vector<8x256xf32> to vector<8xf32>
    %12 = vector.shape_cast %11 : vector<8xf32> to vector<8x1xf32>
    %13 = arith.mulf %6, %6 : vector<8x256xf32>
    %14 = arith.mulf %13, %7 : vector<8x256xf32>
    %cst_7 = arith.constant dense<0.000000e+00> : vector<8xf32>
    %15 = vector.multi_reduction <add>, %14, %cst_7 [1] : vector<8x256xf32> to vector<8xf32>
    %16 = vector.shape_cast %15 : vector<8xf32> to vector<8x1xf32>
    %17 = arith.mulf %13, %6 : vector<8x256xf32>
    %18 = arith.mulf %17, %7 : vector<8x256xf32>
    %cst_8 = arith.constant dense<0.000000e+00> : vector<8xf32>
    %19 = vector.multi_reduction <add>, %18, %cst_8 [1] : vector<8x256xf32> to vector<8xf32>
    %20 = vector.shape_cast %19 : vector<8xf32> to vector<8x1xf32>
    %21 = tpu.concatenate %9, %12, %16, %20 in 1 : vector<8x1xf32>, vector<8x1xf32>, vector<8x1xf32>, vector<8x1xf32> -> vector<8x4xf32>
    %c0_9 = arith.constant 0 : index
    %c0_10 = arith.constant 0 : index
    %22 = vector.load %arg6[%c0_9, %c0_10] : memref<4x8xf32, #tpu.memory_space<vmem>>, vector<4x8xf32>
    %cst_11 = arith.constant dense<0.000000e+00> : vector<4x4xf32>
    %23 = tpu.matmul %22, %21, %cst_11 {dimension_numbers = #tpu.dot_dimension_numbers<[1], [0], [0], [1], [0, 0, 1, 1], [], []>} : vector<4x8xf32>, vector<8x4xf32>, vector<4x4xf32> -> vector<4x4xf32>
    %c0_12 = arith.constant 0 : index
    %c0_13 = arith.constant 0 : index
    %24 = vector.load %arg5[%c0_12, %c0_13] : memref<8x4xf32, #tpu.memory_space<vmem>>, vector<8x4xf32>
    %cst_14 = arith.constant dense<0.000000e+00> : vector<8x4xf32>
    %25 = tpu.matmul %24, %23, %cst_14 {dimension_numbers = #tpu.dot_dimension_numbers<[1], [0], [0], [1], [0, 0, 1, 1], [], []>} : vector<8x4xf32>, vector<4x4xf32>, vector<8x4xf32> -> vector<8x4xf32>
    %26 = vector.extract_strided_slice %25 {offsets = [0, 0], sizes = [8, 1], strides = [1, 1]} : vector<8x4xf32> to vector<8x1xf32>
    %cst_15 = arith.constant 9.998000e-01 : f32
    %27 = vector.broadcast %cst_15 : f32 to vector<8x1xf32>
    %28 = arith.mulf %27, %26 : vector<8x1xf32>
    %29 = vector.shape_cast %28 : vector<8x1xf32> to vector<8x1xf32>
    %30 = vector.broadcast %29 : vector<8x1xf32> to vector<8x256xf32>
    %31 = vector.extract_strided_slice %25 {offsets = [0, 1], sizes = [8, 1], strides = [1, 1]} : vector<8x4xf32> to vector<8x1xf32>
    %cst_16 = arith.constant 1.999600e-04 : f32
    %32 = vector.broadcast %cst_16 : f32 to vector<8x1xf32>
    %33 = arith.mulf %32, %31 : vector<8x1xf32>
    %34 = vector.broadcast %33 : vector<8x1xf32> to vector<8x256xf32>
    %35 = arith.mulf %34, %5 : vector<8x256xf32>
    %36 = arith.addf %30, %35 : vector<8x256xf32>
    %37 = arith.mulf %5, %5 : vector<8x256xf32>
    %38 = vector.extract_strided_slice %25 {offsets = [0, 2], sizes = [8, 1], strides = [1, 1]} : vector<8x4xf32> to vector<8x1xf32>
    %cst_17 = arith.constant 1.999600e-08 : f32
    %39 = vector.broadcast %cst_17 : f32 to vector<8x1xf32>
    %40 = arith.mulf %39, %38 : vector<8x1xf32>
    %41 = vector.broadcast %40 : vector<8x1xf32> to vector<8x256xf32>
    %42 = arith.mulf %41, %37 : vector<8x256xf32>
    %43 = arith.addf %36, %42 : vector<8x256xf32>
    %44 = arith.mulf %37, %5 : vector<8x256xf32>
    %45 = vector.extract_strided_slice %25 {offsets = [0, 3], sizes = [8, 1], strides = [1, 1]} : vector<8x4xf32> to vector<8x1xf32>
    %cst_18 = arith.constant 1.33306669E-12 : f32
    %46 = vector.broadcast %cst_18 : f32 to vector<8x1xf32>
    %47 = arith.mulf %46, %45 : vector<8x1xf32>
    %48 = vector.broadcast %47 : vector<8x1xf32> to vector<8x256xf32>
    %49 = arith.mulf %48, %44 : vector<8x256xf32>
    %50 = arith.addf %43, %49 : vector<8x256xf32>
    %c0_19 = arith.constant 0 : index
    %c0_20 = arith.constant 0 : index
    %c0_21 = arith.constant 0 : index
    %51 = vector.load %arg4[%c0_19, %c0_20, %c0_21] : memref<1x16x8xf32, #tpu.memory_space<vmem>>, vector<1x16x8xf32>
    %52 = vector.shape_cast %51 : vector<1x16x8xf32> to vector<16x8xf32>
    %cst_22 = arith.constant dense<0.000000e+00> : vector<16x256xf32>
    %53 = tpu.matmul %52, %50, %cst_22 {dimension_numbers = #tpu.dot_dimension_numbers<[1], [0], [0], [1], [0, 0, 1, 1], [], []>} : vector<16x8xf32>, vector<8x256xf32>, vector<16x256xf32> -> vector<16x256xf32>
    %cst_23 = arith.constant dense<0.000000e+00> : vector<16xf32>
    %54 = vector.multi_reduction <add>, %53, %cst_23 [1] : vector<16x256xf32> to vector<16xf32>
    %55 = vector.shape_cast %54 : vector<16xf32> to vector<16x1xf32>
    %56 = arith.mulf %53, %53 : vector<16x256xf32>
    %cst_24 = arith.constant dense<0.000000e+00> : vector<16xf32>
    %57 = vector.multi_reduction <add>, %56, %cst_24 [1] : vector<16x256xf32> to vector<16xf32>
    %58 = vector.shape_cast %57 : vector<16xf32> to vector<16x1xf32>
    %59 = tpu.concatenate %55, %58 in 1 : vector<16x1xf32>, vector<16x1xf32> -> vector<16x2xf32>
    %c0_25 = arith.constant 0 : index
    %c0_26 = arith.constant 0 : index
    %60 = vector.load %arg8[%c0_25, %c0_26] : memref<4x16xf32, #tpu.memory_space<vmem>>, vector<4x16xf32>
    %cst_27 = arith.constant dense<0.000000e+00> : vector<4x2xf32>
    %61 = tpu.matmul %60, %59, %cst_27 {dimension_numbers = #tpu.dot_dimension_numbers<[1], [0], [0], [1], [0, 0, 1, 1], [], []>} : vector<4x16xf32>, vector<16x2xf32>, vector<4x2xf32> -> vector<4x2xf32>
    %62 = vector.extract_strided_slice %61 {offsets = [0, 0], sizes = [4, 1], strides = [1, 1]} : vector<4x2xf32> to vector<4x1xf32>
    %cst_28 = arith.constant 9.765625E-4 : f32
    %63 = vector.broadcast %cst_28 : f32 to vector<4x1xf32>
    %64 = arith.mulf %62, %63 : vector<4x1xf32>
    %65 = vector.extract_strided_slice %61 {offsets = [0, 1], sizes = [4, 1], strides = [1, 1]} : vector<4x2xf32> to vector<4x1xf32>
    %cst_29 = arith.constant 9.765625E-4 : f32
    %66 = vector.broadcast %cst_29 : f32 to vector<4x1xf32>
    %67 = arith.mulf %65, %66 : vector<4x1xf32>
    %68 = arith.mulf %64, %64 : vector<4x1xf32>
    %69 = arith.subf %67, %68 : vector<4x1xf32>
    %cst_30 = arith.constant 0.000000e+00 : f32
    %70 = vector.broadcast %cst_30 : f32 to vector<4x1xf32>
    %71 = arith.maximumf %69, %70 : vector<4x1xf32>
    %cst_31 = arith.constant 9.99999974E-6 : f32
    %72 = vector.broadcast %cst_31 : f32 to vector<4x1xf32>
    %73 = arith.addf %71, %72 : vector<4x1xf32>
    %74 = math.rsqrt %73 : vector<4x1xf32>
    %c0_32 = arith.constant 0 : index
    %c0_33 = arith.constant 0 : index
    %75 = vector.load %arg7[%c0_32, %c0_33] : memref<16x4xf32, #tpu.memory_space<vmem>>, vector<16x4xf32>
    %76 = tpu.concatenate %64, %74 in 1 : vector<4x1xf32>, vector<4x1xf32> -> vector<4x2xf32>
    %cst_34 = arith.constant dense<0.000000e+00> : vector<16x2xf32>
    %77 = tpu.matmul %75, %76, %cst_34 {dimension_numbers = #tpu.dot_dimension_numbers<[1], [0], [0], [1], [0, 0, 1, 1], [], []>} : vector<16x4xf32>, vector<4x2xf32>, vector<16x2xf32> -> vector<16x2xf32>
    %78 = vector.extract_strided_slice %77 {offsets = [0, 0], sizes = [16, 1], strides = [1, 1]} : vector<16x2xf32> to vector<16x1xf32>
    %79 = vector.extract_strided_slice %77 {offsets = [0, 1], sizes = [16, 1], strides = [1, 1]} : vector<16x2xf32> to vector<16x1xf32>
    %c0_35 = arith.constant 0 : index
    %c0_36 = arith.constant 0 : index
    %c0_37 = arith.constant 0 : index
    %80 = vector.load %arg9[%c0_35, %c0_36, %c0_37] : memref<1x16x1xf32, #tpu.memory_space<vmem>>, vector<1x16x1xf32>
    %81 = vector.shape_cast %80 : vector<1x16x1xf32> to vector<16x1xf32>
    %82 = arith.mulf %79, %81 : vector<16x1xf32>
    %c0_38 = arith.constant 0 : index
    %c0_39 = arith.constant 0 : index
    %c0_40 = arith.constant 0 : index
    %83 = vector.load %arg10[%c0_38, %c0_39, %c0_40] : memref<1x16x1xf32, #tpu.memory_space<vmem>>, vector<1x16x1xf32>
    %84 = vector.shape_cast %83 : vector<1x16x1xf32> to vector<16x1xf32>
    %85 = arith.mulf %78, %82 : vector<16x1xf32>
    %86 = arith.subf %84, %85 : vector<16x1xf32>
    %87 = vector.broadcast %82 : vector<16x1xf32> to vector<16x256xf32>
    %88 = arith.mulf %53, %87 : vector<16x256xf32>
    %89 = vector.broadcast %86 : vector<16x1xf32> to vector<16x256xf32>
    %90 = arith.addf %88, %89 : vector<16x256xf32>
    %91 = arith.addf %90, %1 : vector<16x256xf32>
    %c0_41 = arith.constant 0 : index
    %c0_42 = arith.constant 0 : index
    %c0_43 = arith.constant 0 : index
    %92 = vector.load %arg11[%c0_41, %c0_42, %c0_43] : memref<1x16x256xf32, #tpu.memory_space<vmem>>, vector<1x16x256xf32>
    %93 = vector.shape_cast %92 : vector<1x16x256xf32> to vector<16x256xf32>
    %94 = vector.shape_cast %91 : vector<16x256xf32> to vector<1x16x256xf32>
    tpu.vector_store %arg11[%c0_41, %c0_42, %c0_43], %94 {strides = array<i32>} : memref<1x16x256xf32, #tpu.memory_space<vmem>>, vector<1x16x256xf32>,
    return
  }
  func.func @transform_0(%arg0: i32, %arg1: i32) -> (i32, i32, i32) {
    %c0_i32 = arith.constant 0 : i32
    %c0_i32_0 = arith.constant 0 : i32
    %c0_i32_1 = arith.constant 0 : i32
    return %arg0, %c0_i32, %c0_i32_0 : i32, i32, i32
  }
  func.func @transform_1(%arg0: i32, %arg1: i32) -> (i32, i32, i32) {
    %c0_i32 = arith.constant 0 : i32
    %c0_i32_0 = arith.constant 0 : i32
    %c0_i32_1 = arith.constant 0 : i32
    return %arg1, %c0_i32, %c0_i32_0 : i32, i32, i32
  }
  func.func @transform_2(%arg0: i32, %arg1: i32) -> (i32, i32, i32) {
    %c0_i32 = arith.constant 0 : i32
    %c0_i32_0 = arith.constant 0 : i32
    %c0_i32_1 = arith.constant 0 : i32
    return %arg1, %c0_i32, %c0_i32_0 : i32, i32, i32
  }
  func.func @transform_3(%arg0: i32, %arg1: i32) -> (i32, i32) {
    %c0_i32 = arith.constant 0 : i32
    %c0_i32_0 = arith.constant 0 : i32
    %c0_i32_1 = arith.constant 0 : i32
    return %c0_i32, %c0_i32_0 : i32, i32
  }
  func.func @transform_4(%arg0: i32, %arg1: i32) -> (i32, i32) {
    %c0_i32 = arith.constant 0 : i32
    %c0_i32_0 = arith.constant 0 : i32
    %c0_i32_1 = arith.constant 0 : i32
    return %c0_i32, %c0_i32_0 : i32, i32
  }
  func.func @transform_5(%arg0: i32, %arg1: i32) -> (i32, i32) {
    %c0_i32 = arith.constant 0 : i32
    %c0_i32_0 = arith.constant 0 : i32
    %c0_i32_1 = arith.constant 0 : i32
    return %c0_i32, %c0_i32_0 : i32, i32
  }
  func.func @transform_6(%arg0: i32, %arg1: i32) -> (i32, i32) {
    %c0_i32 = arith.constant 0 : i32
    %c0_i32_0 = arith.constant 0 : i32
    %c0_i32_1 = arith.constant 0 : i32
    return %c0_i32, %c0_i32_0 : i32, i32
  }
  func.func @transform_7(%arg0: i32, %arg1: i32) -> (i32, i32, i32) {
    %c0_i32 = arith.constant 0 : i32
    %c0_i32_0 = arith.constant 0 : i32
    %c0_i32_1 = arith.constant 0 : i32
    return %arg1, %c0_i32, %c0_i32_0 : i32, i32, i32
  }
  func.func @transform_8(%arg0: i32, %arg1: i32) -> (i32, i32, i32) {
    %c0_i32 = arith.constant 0 : i32
    %c0_i32_0 = arith.constant 0 : i32
    %c0_i32_1 = arith.constant 0 : i32
    return %arg1, %c0_i32, %c0_i32_0 : i32, i32, i32
  }
  func.func @transform_9(%arg0: i32, %arg1: i32) -> (i32, i32, i32) {
    %c0_i32 = arith.constant 0 : i32
    %c0_i32_0 = arith.constant 0 : i32
    return %arg0, %arg1, %c0_i32 : i32, i32, i32
  }
}

module attributes {stable_mosaic.version = 11 : i64} {
  func.func @_cgnlx_kernel(%arg0: i32, %arg1: i32, %arg2: memref<1x16x256xf32, #tpu.memory_space<vmem>>, %arg3: memref<1x24x16xf32, #tpu.memory_space<vmem>>, %arg4: memref<1x16x8xf32, #tpu.memory_space<vmem>>, %arg5: memref<8x4xf32, #tpu.memory_space<vmem>>, %arg6: memref<4x8xf32, #tpu.memory_space<vmem>>, %arg7: memref<16x4xf32, #tpu.memory_space<vmem>>, %arg8: memref<4x16xf32, #tpu.memory_space<vmem>>, %arg9: memref<1x16x1xf32, #tpu.memory_space<vmem>>, %arg10: memref<1x16x1xf32, #tpu.memory_space<vmem>>, %arg11: memref<1x16x256xf32, #tpu.memory_space<vmem>>) attributes {dimension_semantics = [#tpu.dimension_semantics<parallel>, #tpu.dimension_semantics<parallel>], iteration_bounds = array<i64: 2, 1>, scalar_prefetch = 0 : i64, scratch_operands = 0 : i64, tpu.core_type = #tpu.core_type<tc>, window_params = [{transform_indices = @transform_0, window_bounds = array<i64: 1, 16, 256>}, {transform_indices = @transform_1, window_bounds = array<i64: 1, 24, 16>}, {transform_indices = @transform_2, window_bounds = array<i64: 1, 16, 8>}, {pipeline_mode = #tpu.pipeline_mode<synchronous>, transform_indices = @transform_3, window_bounds = array<i64: 8, 4>}, {pipeline_mode = #tpu.pipeline_mode<synchronous>, transform_indices = @transform_4, window_bounds = array<i64: 4, 8>}, {pipeline_mode = #tpu.pipeline_mode<synchronous>, transform_indices = @transform_5, window_bounds = array<i64: 16, 4>}, {pipeline_mode = #tpu.pipeline_mode<synchronous>, transform_indices = @transform_6, window_bounds = array<i64: 4, 16>}, {transform_indices = @transform_7, window_bounds = array<i64: 1, 16, 1>}, {transform_indices = @transform_8, window_bounds = array<i64: 1, 16, 1>}, {transform_indices = @transform_9, window_bounds = array<i64: 1, 16, 256>}]} {
    %c0 = arith.constant 0 : index
    %c0_0 = arith.constant 0 : index
    %c0_1 = arith.constant 0 : index
    %0 = vector.load %arg2[%c0, %c0_0, %c0_1] : memref<1x16x256xf32, #tpu.memory_space<vmem>>, vector<1x16x256xf32>
    %1 = vector.shape_cast %0 : vector<1x16x256xf32> to vector<16x256xf32>
    %c0_2 = arith.constant 0 : index
    %c0_3 = arith.constant 0 : index
    %c0_4 = arith.constant 0 : index
    %2 = vector.load %arg3[%c0_2, %c0_3, %c0_4] : memref<1x24x16xf32, #tpu.memory_space<vmem>>, vector<1x24x16xf32>
    %3 = vector.shape_cast %2 : vector<1x24x16xf32> to vector<24x16xf32>
    %cst = arith.constant dense<0.000000e+00> : vector<24x256xf32>
    %4 = tpu.matmul %3, %1, %cst {dimension_numbers = #tpu.dot_dimension_numbers<[1], [0], [0], [1], [0, 0, 1, 1], [], []>} : vector<24x16xf32>, vector<16x256xf32>, vector<24x256xf32> -> vector<24x256xf32>
    %5 = vector.extract_strided_slice %4 {offsets = [0, 0], sizes = [8, 256], strides = [1, 1]} : vector<24x256xf32> to vector<8x256xf32>
    %6 = vector.extract_strided_slice %4 {offsets = [8, 0], sizes = [8, 256], strides = [1, 1]} : vector<24x256xf32> to vector<8x256xf32>
    %7 = vector.extract_strided_slice %4 {offsets = [16, 0], sizes = [8, 256], strides = [1, 1]} : vector<24x256xf32> to vector<8x256xf32>
    %cst_5 = arith.constant dense<0.000000e+00> : vector<8xf32>
    %8 = vector.multi_reduction <add>, %7, %cst_5 [1] : vector<8x256xf32> to vector<8xf32>
    %9 = vector.shape_cast %8 : vector<8xf32> to vector<8x1xf32>
    %10 = arith.mulf %6, %7 : vector<8x256xf32>
    %cst_6 = arith.constant dense<0.000000e+00> : vector<8xf32>
    %11 = vector.multi_reduction <add>, %10, %cst_6 [1] : vector<8x256xf32> to vector<8xf32>
    %12 = vector.shape_cast %11 : vector<8xf32> to vector<8x1xf32>
    %13 = arith.mulf %6, %6 : vector<8x256xf32>
    %14 = arith.mulf %13, %7 : vector<8x256xf32>
    %cst_7 = arith.constant dense<0.000000e+00> : vector<8xf32>
    %15 = vector.multi_reduction <add>, %14, %cst_7 [1] : vector<8x256xf32> to vector<8xf32>
    %16 = vector.shape_cast %15 : vector<8xf32> to vector<8x1xf32>
    %17 = arith.mulf %13, %6 : vector<8x256xf32>
    %18 = arith.mulf %17, %7 : vector<8x256xf32>
    %cst_8 = arith.constant dense<0.000000e+00> : vector<8xf32>
    %19 = vector.multi_reduction <add>, %18, %cst_8 [1] : vector<8x256xf32> to vector<8xf32>
    %20 = vector.shape_cast %19 : vector<8xf32> to vector<8x1xf32>
    %21 = tpu.concatenate %9, %12, %16, %20 in 1 : vector<8x1xf32>, vector<8x1xf32>, vector<8x1xf32>, vector<8x1xf32> -> vector<8x4xf32>
    %c0_9 = arith.constant 0 : index
    %c0_10 = arith.constant 0 : index
    %22 = vector.load %arg6[%c0_9, %c0_10] : memref<4x8xf32, #tpu.memory_space<vmem>>, vector<4x8xf32>
    %cst_11 = arith.constant dense<0.000000e+00> : vector<4x4xf32>
    %23 = tpu.matmul %22, %21, %cst_11 {dimension_numbers = #tpu.dot_dimension_numbers<[1], [0], [0], [1], [0, 0, 1, 1], [], []>} : vector<4x8xf32>, vector<8x4xf32>, vector<4x4xf32> -> vector<4x4xf32>
    %c0_12 = arith.constant 0 : index
    %c0_13 = arith.constant 0 : index
    %24 = vector.load %arg5[%c0_12, %c0_13] : memref<8x4xf32, #tpu.memory_space<vmem>>, vector<8x4xf32>
    %cst_14 = arith.constant dense<0.000000e+00> : vector<8x4xf32>
    %25 = tpu.matmul %24, %23, %cst_14 {dimension_numbers = #tpu.dot_dimension_numbers<[1], [0], [0], [1], [0, 0, 1, 1], [], []>} : vector<8x4xf32>, vector<4x4xf32>, vector<8x4xf32> -> vector<8x4xf32>
    %26 = vector.extract_strided_slice %25 {offsets = [0, 0], sizes = [8, 1], strides = [1, 1]} : vector<8x4xf32> to vector<8x1xf32>
    %cst_15 = arith.constant 9.998000e-01 : f32
    %27 = vector.broadcast %cst_15 : f32 to vector<8x1xf32>
    %28 = arith.mulf %27, %26 : vector<8x1xf32>
    %29 = vector.shape_cast %28 : vector<8x1xf32> to vector<8x1xf32>
    %30 = vector.broadcast %29 : vector<8x1xf32> to vector<8x256xf32>
    %31 = vector.extract_strided_slice %25 {offsets = [0, 1], sizes = [8, 1], strides = [1, 1]} : vector<8x4xf32> to vector<8x1xf32>
    %cst_16 = arith.constant 1.999600e-04 : f32
    %32 = vector.broadcast %cst_16 : f32 to vector<8x1xf32>
    %33 = arith.mulf %32, %31 : vector<8x1xf32>
    %34 = vector.broadcast %33 : vector<8x1xf32> to vector<8x256xf32>
    %35 = arith.mulf %34, %5 : vector<8x256xf32>
    %36 = arith.addf %30, %35 : vector<8x256xf32>
    %37 = arith.mulf %5, %5 : vector<8x256xf32>
    %38 = vector.extract_strided_slice %25 {offsets = [0, 2], sizes = [8, 1], strides = [1, 1]} : vector<8x4xf32> to vector<8x1xf32>
    %cst_17 = arith.constant 1.999600e-08 : f32
    %39 = vector.broadcast %cst_17 : f32 to vector<8x1xf32>
    %40 = arith.mulf %39, %38 : vector<8x1xf32>
    %41 = vector.broadcast %40 : vector<8x1xf32> to vector<8x256xf32>
    %42 = arith.mulf %41, %37 : vector<8x256xf32>
    %43 = arith.addf %36, %42 : vector<8x256xf32>
    %44 = arith.mulf %37, %5 : vector<8x256xf32>
    %45 = vector.extract_strided_slice %25 {offsets = [0, 3], sizes = [8, 1], strides = [1, 1]} : vector<8x4xf32> to vector<8x1xf32>
    %cst_18 = arith.constant 1.33306669E-12 : f32
    %46 = vector.broadcast %cst_18 : f32 to vector<8x1xf32>
    %47 = arith.mulf %46, %45 : vector<8x1xf32>
    %48 = vector.broadcast %47 : vector<8x1xf32> to vector<8x256xf32>
    %49 = arith.mulf %48, %44 : vector<8x256xf32>
    %50 = arith.addf %43, %49 : vector<8x256xf32>
    %c0_19 = arith.constant 0 : index
    %c0_20 = arith.constant 0 : index
    %c0_21 = arith.constant 0 : index
    %51 = vector.load %arg4[%c0_19, %c0_20, %c0_21] : memref<1x16x8xf32, #tpu.memory_space<vmem>>, vector<1x16x8xf32>
    %52 = vector.shape_cast %51 : vector<1x16x8xf32> to vector<16x8xf32>
    %cst_22 = arith.constant dense<0.000000e+00> : vector<16x256xf32>
    %53 = tpu.matmul %52, %50, %cst_22 {dimension_numbers = #tpu.dot_dimension_numbers<[1], [0], [0], [1], [0, 0, 1, 1], [], []>} : vector<16x8xf32>, vector<8x256xf32>, vector<16x256xf32> -> vector<16x256xf32>
    %cst_23 = arith.constant dense<0.000000e+00> : vector<16xf32>
    %54 = vector.multi_reduction <add>, %53, %cst_23 [1] : vector<16x256xf32> to vector<16xf32>
    %55 = vector.shape_cast %54 : vector<16xf32> to vector<16x1xf32>
    %56 = arith.mulf %53, %53 : vector<16x256xf32>
    %cst_24 = arith.constant dense<0.000000e+00> : vector<16xf32>
    %57 = vector.multi_reduction <add>, %56, %cst_24 [1] : vector<16x256xf32> to vector<16xf32>
    %58 = vector.shape_cast %57 : vector<16xf32> to vector<16x1xf32>
    %59 = tpu.concatenate %55, %58 in 1 : vector<16x1xf32>, vector<16x1xf32> -> vector<16x2xf32>
    %c0_25 = arith.constant 0 : index
    %c0_26 = arith.constant 0 : index
    %60 = vector.load %arg8[%c0_25, %c0_26] : memref<4x16xf32, #tpu.memory_space<vmem>>, vector<4x16xf32>
    %cst_27 = arith.constant dense<0.000000e+00> : vector<4x2xf32>
    %61 = tpu.matmul %60, %59, %cst_27 {dimension_numbers = #tpu.dot_dimension_numbers<[1], [0], [0], [1], [0, 0, 1, 1], [], []>} : vector<4x16xf32>, vector<16x2xf32>, vector<4x2xf32> -> vector<4x2xf32>
    %62 = vector.extract_strided_slice %61 {offsets = [0, 0], sizes = [4, 1], strides = [1, 1]} : vector<4x2xf32> to vector<4x1xf32>
    %cst_28 = arith.constant 9.765625E-4 : f32
    %63 = vector.broadcast %cst_28 : f32 to vector<4x1xf32>
    %64 = arith.mulf %62, %63 : vector<4x1xf32>
    %65 = vector.extract_strided_slice %61 {offsets = [0, 1], sizes = [4, 1], strides = [1, 1]} : vector<4x2xf32> to vector<4x1xf32>
    %cst_29 = arith.constant 9.765625E-4 : f32
    %66 = vector.broadcast %cst_29 : f32 to vector<4x1xf32>
    %67 = arith.mulf %65, %66 : vector<4x1xf32>
    %68 = arith.mulf %64, %64 : vector<4x1xf32>
    %69 = arith.subf %67, %68 : vector<4x1xf32>
    %cst_30 = arith.constant 0.000000e+00 : f32
    %70 = vector.broadcast %cst_30 : f32 to vector<4x1xf32>
    %71 = arith.maximumf %69, %70 : vector<4x1xf32>
    %cst_31 = arith.constant 9.99999974E-6 : f32
    %72 = vector.broadcast %cst_31 : f32 to vector<4x1xf32>
    %73 = arith.addf %71, %72 : vector<4x1xf32>
    %74 = math.rsqrt %73 : vector<4x1xf32>
    %c0_32 = arith.constant 0 : index
    %c0_33 = arith.constant 0 : index
    %75 = vector.load %arg7[%c0_32, %c0_33] : memref<16x4xf32, #tpu.memory_space<vmem>>, vector<16x4xf32>
    %76 = tpu.concatenate %64, %74 in 1 : vector<4x1xf32>, vector<4x1xf32> -> vector<4x2xf32>
    %cst_34 = arith.constant dense<0.000000e+00> : vector<16x2xf32>
    %77 = tpu.matmul %75, %76, %cst_34 {dimension_numbers = #tpu.dot_dimension_numbers<[1], [0], [0], [1], [0, 0, 1, 1], [], []>} : vector<16x4xf32>, vector<4x2xf32>, vector<16x2xf32> -> vector<16x2xf32>
    %78 = vector.extract_strided_slice %77 {offsets = [0, 0], sizes = [16, 1], strides = [1, 1]} : vector<16x2xf32> to vector<16x1xf32>
    %79 = vector.extract_strided_slice %77 {offsets = [0, 1], sizes = [16, 1], strides = [1, 1]} : vector<16x2xf32> to vector<16x1xf32>
    %c0_35 = arith.constant 0 : index
    %c0_36 = arith.constant 0 : index
    %c0_37 = arith.constant 0 : index
    %80 = vector.load %arg9[%c0_35, %c0_36, %c0_37] : memref<1x16x1xf32, #tpu.memory_space<vmem>>, vector<1x16x1xf32>
    %81 = vector.shape_cast %80 : vector<1x16x1xf32> to vector<16x1xf32>
    %82 = arith.mulf %79, %81 : vector<16x1xf32>
    %c0_38 = arith.constant 0 : index
    %c0_39 = arith.constant 0 : index
    %c0_40 = arith.constant 0 : index
    %83 = vector.load %arg10[%c0_38, %c0_39, %c0_40] : memref<1x16x1xf32, #tpu.memory_space<vmem>>, vector<1x16x1xf32>
    %84 = vector.shape_cast %83 : vector<1x16x1xf32> to vector<16x1xf32>
    %85 = arith.mulf %78, %82 : vector<16x1xf32>
    %86 = arith.subf %84, %85 : vector<16x1xf32>
    %87 = vector.broadcast %82 : vector<16x1xf32> to vector<16x256xf32>
    %88 = arith.mulf %53, %87 : vector<16x256xf32>
    %89 = vector.broadcast %86 : vector<16x1xf32> to vector<16x256xf32>
    %90 = arith.addf %88, %89 : vector<16x256xf32>
    %91 = arith.addf %90, %1 : vector<16x256xf32>
    %c0_41 = arith.constant 0 : index
    %c0_42 = arith.constant 0 : index
    %c0_43 = arith.constant 0 : index
    %92 = vector.load %arg11[%c0_41, %c0_42, %c0_43] : memref<1x16x256xf32, #tpu.memory_space<vmem>>, vector<1x16x256xf32>
    %93 = vector.shape_cast %92 : vector<1x16x256xf32> to vector<16x256xf32>
    %94 = vector.shape_cast %91 : vector<16x256xf32> to vector<1x16x256xf32>
    tpu.vector_store %arg11[%c0_41, %c0_42, %c0_43], %94 {strides = array<i32>} : memref<1x16x256xf32, #tpu.memory_space<vmem>>, vector<1x16x256xf32>,
    return
  }
  func.func @transform_0(%arg0: i32, %arg1: i32) -> (i32, i32, i32) {
    %c0_i32 = arith.constant 0 : i32
    %c0_i32_0 = arith.constant 0 : i32
    %c0_i32_1 = arith.constant 0 : i32
    return %arg0, %c0_i32, %c0_i32_0 : i32, i32, i32
  }
  func.func @transform_1(%arg0: i32, %arg1: i32) -> (i32, i32, i32) {
    %c0_i32 = arith.constant 0 : i32
    %c0_i32_0 = arith.constant 0 : i32
    %c0_i32_1 = arith.constant 0 : i32
    return %arg1, %c0_i32, %c0_i32_0 : i32, i32, i32
  }
  func.func @transform_2(%arg0: i32, %arg1: i32) -> (i32, i32, i32) {
    %c0_i32 = arith.constant 0 : i32
    %c0_i32_0 = arith.constant 0 : i32
    %c0_i32_1 = arith.constant 0 : i32
    return %arg1, %c0_i32, %c0_i32_0 : i32, i32, i32
  }
  func.func @transform_3(%arg0: i32, %arg1: i32) -> (i32, i32) {
    %c0_i32 = arith.constant 0 : i32
    %c0_i32_0 = arith.constant 0 : i32
    %c0_i32_1 = arith.constant 0 : i32
    return %c0_i32, %c0_i32_0 : i32, i32
  }
  func.func @transform_4(%arg0: i32, %arg1: i32) -> (i32, i32) {
    %c0_i32 = arith.constant 0 : i32
    %c0_i32_0 = arith.constant 0 : i32
    %c0_i32_1 = arith.constant 0 : i32
    return %c0_i32, %c0_i32_0 : i32, i32
  }
  func.func @transform_5(%arg0: i32, %arg1: i32) -> (i32, i32) {
    %c0_i32 = arith.constant 0 : i32
    %c0_i32_0 = arith.constant 0 : i32
    %c0_i32_1 = arith.constant 0 : i32
    return %c0_i32, %c0_i32_0 : i32, i32
  }
  func.func @transform_6(%arg0: i32, %arg1: i32) -> (i32, i32) {
    %c0_i32 = arith.constant 0 : i32
    %c0_i32_0 = arith.constant 0 : i32
    %c0_i32_1 = arith.constant 0 : i32
    return %c0_i32, %c0_i32_0 : i32, i32
  }
  func.func @transform_7(%arg0: i32, %arg1: i32) -> (i32, i32, i32) {
    %c0_i32 = arith.constant 0 : i32
    %c0_i32_0 = arith.constant 0 : i32
    %c0_i32_1 = arith.constant 0 : i32
    return %arg1, %c0_i32, %c0_i32_0 : i32, i32, i32
  }
  func.func @transform_8(%arg0: i32, %arg1: i32) -> (i32, i32, i32) {
    %c0_i32 = arith.constant 0 : i32
    %c0_i32_0 = arith.constant 0 : i32
    %c0_i32_1 = arith.constant 0 : i32
    return %arg1, %c0_i32, %c0_i32_0 : i32, i32, i32
  }
  func.func @transform_9(%arg0: i32, %arg1: i32) -> (i32, i32, i32) {
    %c0_i32 = arith.constant 0 : i32
    %c0_i32_0 = arith.constant 0 : i32
    return %arg0, %arg1, %c0_i32 : i32, i32, i32
  }
}

</mosaic_0001>

<llo_original>
// kernel: tpu_custom_call.1
$region0: #{tpu_custom_call.1}
  #allocation0 [shape = 'u32[]', space=smem, size = 0x4, offset = 0x4, fixed_abs, tag = 'smem constant byte address 0x4 - core index']
  #allocation1 [shape = 'u32[144,128]{1,0:T(1,128)}', space=vmem, size = 0x12000, scoped, tag = 'internal scratch']
  %s0 = inlined_call_operand.vmem [shape: f32[2,16,256], index: 0, kind: input, shape index: {}]
  %s1 = inlined_call_operand.vmem [shape: f32[1,24,16], index: 1, kind: input, shape index: {}]
  %s2 = inlined_call_operand.vmem [shape: f32[1,16,8], index: 2, kind: input, shape index: {}]
  %s3 = inlined_call_operand.vmem [shape: f32[8,4], index: 3, kind: input, shape index: {}]
  %s4 = inlined_call_operand.vmem [shape: f32[4,8], index: 4, kind: input, shape index: {}]
  %s5 = inlined_call_operand.vmem [shape: f32[16,4], index: 5, kind: input, shape index: {}]
  %s6 = inlined_call_operand.vmem [shape: f32[4,16], index: 6, kind: input, shape index: {}]
  %s7 = inlined_call_operand.vmem [shape: f32[1,16,1], index: 7, kind: input, shape index: {}]
  %s8 = inlined_call_operand.vmem [shape: f32[1,16,1], index: 8, kind: input, shape index: {}]
  %s9 = inlined_call_operand.hbm [shape: f32[2,16,256], index: 9, kind: output, shape index: {}]
  %s10 = sld [smem:[#allocation0]]
  $region69: #{tpu_custom_call.1} parent=0
    _
  %s12 = ssub.s32 1, %s10
  %s13 = scalar_select 0, %s12, %s10
  $region1: #{tpu_custom_call.1} parent=0
    #allocation2 [shape = 'u8[32768]{0}', space=vmem, size = 0x8000, scoped, tag = 'output window, operand 0']
    #allocation3 [shape = 's32[2]{0}', space=sflag, size = 0x8, scoped, tag = 'scoped memory for tpu_custom_call.1']
    %14 = vsyncpa [#allocation3], 0
    %s15 = scalar_lea.sflag [#allocation3], 1
    %16 = vsyncpa %s15, 0
    loop: start=0, step=1, limit=4
    $region2: #{tpu_custom_call.1} parent=1 // loop_pre_header
      _
    $region3: #{tpu_custom_call.1} parent=1 // loop_header
      %s18 = sphi 0, %s22
      %p19 = scmp.ge.s32.totalorder %s18, 4
      %s25 = sphi 0, %s37
      %s26 = sphi 0, %s33
      %s27 = sphi 0, %s25
      %s28 = sphi 0, %s26
      %s29 = sphi 0, %s27
      %s30 = sphi 0, %s28
      %s40 = sphi 0, %s42
      %s43 = sphi 0, %s40
      %s44 = sphi 0, %s43
      %s60 = sphi 0, %s44
      %s66 = sphi 0, %s68
      %s69 = sphi 0, %s66
      %s70 = sphi 0, %s69
      %s86 = sphi 0, %s70
      %s92 = sphi 0, %s94
      %s95 = sphi 0, %s92
      %s96 = sphi 0, %s95
      %s112 = sphi 0, %s96
      %s116 = sphi 0, %s116
      %s118 = sphi 0, %s116
      %s119 = sphi 0, %s118
      %s133 = sphi 0, %s119
      %s137 = sphi 0, %s137
      %s139 = sphi 0, %s137
      %s140 = sphi 0, %s139
      %s154 = sphi 0, %s140
      %s158 = sphi 0, %s158
      %s160 = sphi 0, %s158
      %s161 = sphi 0, %s160
      %s175 = sphi 0, %s161
      %s179 = sphi 0, %s179
      %s181 = sphi 0, %s179
      %s182 = sphi 0, %s181
      %s196 = sphi 0, %s182
      %s202 = sphi 0, %s204
      %s205 = sphi 0, %s202
      %s206 = sphi 0, %s205
      %s222 = sphi 0, %s206
      %s228 = sphi 0, %s230
      %s231 = sphi 0, %s228
      %s232 = sphi 0, %s231
      %s248 = sphi 0, %s232
      %s256 = sphi 0, %s258
      %s259 = sphi 0, %s256
      %s260 = sphi 0, %s259
      %s276 = sphi 0, %s260
    $region4: #{tpu_custom_call.1} parent=1 // loop_header_branch
      %21 = sbr.rel (%p19) target = $region8
    $region5: #{tpu_custom_call.1} parent=1 // loop_body
      %s23 = ssub.s32 %s18, 1
      %s24 = ssub.s32 %s18, 2
      %s31 = sadd.s32 1, %s26
      %p32 = scmp.ge.s32.totalorder %s31, 1
      %s33 = scalar_select %p32, 0, %s31
      %s34 = sadd.s32 1, %s25
      %s35 = scalar_select %p32, %s34, %s25
      %p36 = scmp.ge.s32.totalorder %s35, 2
      %s37 = scalar_select %p36, 0, %s35
      %s38 = ssub.s32 %s25, %s37
      %p39 = scmp.eq.s32.totalorder %s38, 0
      %s41 = sadd.s32 %s40, 1
      %s42 = scalar_select %p39, %s40, %s41
      %p45 = pneg %p39
      %p46 = scmp.eq.s32.totalorder %s18, 1
      %p47 = por %p45, %p46
      %p48 = scmp.ne.s32.totalorder %s40, %s43
      %p49 = scmp.eq.s32.totalorder %s18, 0
      %p50 = por %p48, %p49
      %p51 = scmp.ne.s32.totalorder %s40, %s43
      %p52 = scmp.eq.s32.totalorder %s23, 1
      %p53 = por %p51, %p52
      %p54 = scmp.ne.s32.totalorder %s43, %s44
      %p55 = scmp.eq.s32.totalorder %s23, 0
      %p56 = por %p54, %p55
      %p57 = scmp.ne.s32.totalorder %s43, %s44
      %p58 = scmp.eq.s32.totalorder %s24, 1
      %p59 = por %p57, %p58
      %p61 = scmp.ne.s32.totalorder %s44, %s60
      %p62 = scmp.eq.s32.totalorder %s24, 0
      %p63 = por %p61, %p62
      %s64 = ssub.s32 %s26, %s33
      %p65 = scmp.eq.s32.totalorder %s64, 0
      %s67 = sadd.s32 %s66, 1
      %s68 = scalar_select %p65, %s66, %s67
      %p71 = pneg %p65
      %p72 = scmp.eq.s32.totalorder %s18, 1
      %p73 = por %p71, %p72
      %p74 = scmp.ne.s32.totalorder %s66, %s69
      %p75 = scmp.eq.s32.totalorder %s18, 0
      %p76 = por %p74, %p75
      %p77 = scmp.ne.s32.totalorder %s66, %s69
      %p78 = scmp.eq.s32.totalorder %s23, 1
      %p79 = por %p77, %p78
      %p80 = scmp.ne.s32.totalorder %s69, %s70
      %p81 = scmp.eq.s32.totalorder %s23, 0
      %p82 = por %p80, %p81
      %p83 = scmp.ne.s32.totalorder %s69, %s70
      %p84 = scmp.eq.s32.totalorder %s24, 1
      %p85 = por %p83, %p84
      %p87 = scmp.ne.s32.totalorder %s70, %s86
      %p88 = scmp.eq.s32.totalorder %s24, 0
      %p89 = por %p87, %p88
      %s90 = ssub.s32 %s26, %s33
      %p91 = scmp.eq.s32.totalorder %s90, 0
      %s93 = sadd.s32 %s92, 1
      %s94 = scalar_select %p91, %s92, %s93
      %p97 = pneg %p91
      %p98 = scmp.eq.s32.totalorder %s18, 1
      %p99 = por %p97, %p98
      %p100 = scmp.ne.s32.totalorder %s92, %s95
      %p101 = scmp.eq.s32.totalorder %s18, 0
      %p102 = por %p100, %p101
      %p103 = scmp.ne.s32.totalorder %s92, %s95
      %p104 = scmp.eq.s32.totalorder %s23, 1
      %p105 = por %p103, %p104
      %p106 = scmp.ne.s32.totalorder %s95, %s96
      %p107 = scmp.eq.s32.totalorder %s23, 0
      %p108 = por %p106, %p107
      %p109 = scmp.ne.s32.totalorder %s95, %s96
      %p110 = scmp.eq.s32.totalorder %s24, 1
      %p111 = por %p109, %p110
      %p113 = scmp.ne.s32.totalorder %s96, %s112
      %p114 = scmp.eq.s32.totalorder %s24, 0
      %p115 = por %p113, %p114
      %s117 = sadd.s32 %s116, 1
      %p120 = scmp.eq.s32.totalorder %s18, 1
      %p121 = scmp.ne.s32.totalorder %s116, %s118
      %p122 = scmp.eq.s32.totalorder %s18, 0
      %p123 = por %p121, %p122
      %p124 = scmp.ne.s32.totalorder %s116, %s118
      %p125 = scmp.eq.s32.totalorder %s23, 1
      %p126 = por %p124, %p125
      %p127 = scmp.ne.s32.totalorder %s118, %s119
      %p128 = scmp.eq.s32.totalorder %s23, 0
      %p129 = por %p127, %p128
      %p130 = scmp.ne.s32.totalorder %s118, %s119
      %p131 = scmp.eq.s32.totalorder %s24, 1
      %p132 = por %p130, %p131
      %p134 = scmp.ne.s32.totalorder %s119, %s133
      %p135 = scmp.eq.s32.totalorder %s24, 0
      %p136 = por %p134, %p135
      %s138 = sadd.s32 %s137, 1
      %p141 = scmp.eq.s32.totalorder %s18, 1
      %p142 = scmp.ne.s32.totalorder %s137, %s139
      %p143 = scmp.eq.s32.totalorder %s18, 0
      %p144 = por %p142, %p143
      %p145 = scmp.ne.s32.totalorder %s137, %s139
      %p146 = scmp.eq.s32.totalorder %s23, 1
      %p147 = por %p145, %p146
      %p148 = scmp.ne.s32.totalorder %s139, %s140
      %p149 = scmp.eq.s32.totalorder %s23, 0
      %p150 = por %p148, %p149
      %p151 = scmp.ne.s32.totalorder %s139, %s140
      %p152 = scmp.eq.s32.totalorder %s24, 1
      %p153 = por %p151, %p152
      %p155 = scmp.ne.s32.totalorder %s140, %s154
      %p156 = scmp.eq.s32.totalorder %s24, 0
      %p157 = por %p155, %p156
      %s159 = sadd.s32 %s158, 1
      %p162 = scmp.eq.s32.totalorder %s18, 1
      %p163 = scmp.ne.s32.totalorder %s158, %s160
      %p164 = scmp.eq.s32.totalorder %s18, 0
      %p165 = por %p163, %p164
      %p166 = scmp.ne.s32.totalorder %s158, %s160
      %p167 = scmp.eq.s32.totalorder %s23, 1
      %p168 = por %p166, %p167
      %p169 = scmp.ne.s32.totalorder %s160, %s161
      %p170 = scmp.eq.s32.totalorder %s23, 0
      %p171 = por %p169, %p170
      %p172 = scmp.ne.s32.totalorder %s160, %s161
      %p173 = scmp.eq.s32.totalorder %s24, 1
      %p174 = por %p172, %p173
      %p176 = scmp.ne.s32.totalorder %s161, %s175
      %p177 = scmp.eq.s32.totalorder %s24, 0
      %p178 = por %p176, %p177
      %s180 = sadd.s32 %s179, 1
      %p183 = scmp.eq.s32.totalorder %s18, 1
      %p184 = scmp.ne.s32.totalorder %s179, %s181
      %p185 = scmp.eq.s32.totalorder %s18, 0
      %p186 = por %p184, %p185
      %p187 = scmp.ne.s32.totalorder %s179, %s181
      %p188 = scmp.eq.s32.totalorder %s23, 1
      %p189 = por %p187, %p188
      %p190 = scmp.ne.s32.totalorder %s181, %s182
      %p191 = scmp.eq.s32.totalorder %s23, 0
      %p192 = por %p190, %p191
      %p193 = scmp.ne.s32.totalorder %s181, %s182
      %p194 = scmp.eq.s32.totalorder %s24, 1
      %p195 = por %p193, %p194
      %p197 = scmp.ne.s32.totalorder %s182, %s196
      %p198 = scmp.eq.s32.totalorder %s24, 0
      %p199 = por %p197, %p198
      %s200 = ssub.s32 %s26, %s33
      %p201 = scmp.eq.s32.totalorder %s200, 0
      %s203 = sadd.s32 %s202, 1
      %s204 = scalar_select %p201, %s202, %s203
      %p207 = pneg %p201
      %p208 = scmp.eq.s32.totalorder %s18, 1
      %p209 = por %p207, %p208
      %p210 = scmp.ne.s32.totalorder %s202, %s205
      %p211 = scmp.eq.s32.totalorder %s18, 0
      %p212 = por %p210, %p211
      %p213 = scmp.ne.s32.totalorder %s202, %s205
      %p214 = scmp.eq.s32.totalorder %s23, 1
      %p215 = por %p213, %p214
      %p216 = scmp.ne.s32.totalorder %s205, %s206
      %p217 = scmp.eq.s32.totalorder %s23, 0
      %p218 = por %p216, %p217
      %p219 = scmp.ne.s32.totalorder %s205, %s206
      %p220 = scmp.eq.s32.totalorder %s24, 1
      %p221 = por %p219, %p220
      %p223 = scmp.ne.s32.totalorder %s206, %s222
      %p224 = scmp.eq.s32.totalorder %s24, 0
      %p225 = por %p223, %p224
      %s226 = ssub.s32 %s26, %s33
      %p227 = scmp.eq.s32.totalorder %s226, 0
      %s229 = sadd.s32 %s228, 1
      %s230 = scalar_select %p227, %s228, %s229
      %p233 = pneg %p227
      %p234 = scmp.eq.s32.totalorder %s18, 1
      %p235 = por %p233, %p234
      %p236 = scmp.ne.s32.totalorder %s228, %s231
      %p237 = scmp.eq.s32.totalorder %s18, 0
      %p238 = por %p236, %p237
      %p239 = scmp.ne.s32.totalorder %s228, %s231
      %p240 = scmp.eq.s32.totalorder %s23, 1
      %p241 = por %p239, %p240
      %p242 = scmp.ne.s32.totalorder %s231, %s232
      %p243 = scmp.eq.s32.totalorder %s23, 0
      %p244 = por %p242, %p243
      %p245 = scmp.ne.s32.totalorder %s231, %s232
      %p246 = scmp.eq.s32.totalorder %s24, 1
      %p247 = por %p245, %p246
      %p249 = scmp.ne.s32.totalorder %s232, %s248
      %p250 = scmp.eq.s32.totalorder %s24, 0
      %p251 = por %p249, %p250
      %s252 = ssub.s32 %s25, %s37
      %s253 = ssub.s32 %s26, %s33
      %s254 = sor.u32 %s252, %s253
      %p255 = scmp.eq.s32.totalorder %s254, 0
      %s257 = sadd.s32 %s256, 1
      %s258 = scalar_select %p255, %s256, %s257
      %p261 = pneg %p255
      %p262 = scmp.eq.s32.totalorder %s18, 1
      %p263 = por %p261, %p262
      %p264 = scmp.ne.s32.totalorder %s256, %s259
      %p265 = scmp.eq.s32.totalorder %s18, 0
      %p266 = por %p264, %p265
      %p267 = scmp.ne.s32.totalorder %s256, %s259
      %p268 = scmp.eq.s32.totalorder %s23, 1
      %p269 = por %p267, %p268
      %p270 = scmp.ne.s32.totalorder %s259, %s260
      %p271 = scmp.eq.s32.totalorder %s23, 0
      %p272 = por %p270, %p271
      %p273 = scmp.ne.s32.totalorder %s259, %s260
      %p274 = scmp.eq.s32.totalorder %s24, 1
      %p275 = por %p273, %p274
      %p277 = scmp.ne.s32.totalorder %s260, %s276
      %p278 = scmp.eq.s32.totalorder %s24, 0
      %p279 = por %p277, %p278
      %p280 = scmp.le.s32.totalorder 1, %s18
      %p281 = scmp.lt.s32.totalorder %s18, 3
      %p282 = pnand %p280, %p281
      %p283 = pneg %p282
      // Predicated region
      $region9: #{tpu_custom_call.1} parent=5 // pred_check
        _
      $region10: #{tpu_custom_call.1} parent=5 // pred_check_branch
        %285 = sbr.rel (%p282) target = $region12
      $region11: #{tpu_custom_call.1} parent=5 // pred_region
        %s286 = ssub.s32 %s18, 1
        // Predicated region
        $region13: #{tpu_custom_call.1} parent=11 // pred_check
          %p287 = pneg %p82
        $region14: #{tpu_custom_call.1} parent=11 // pred_check_branch
          %289 = sbr.rel (%p287) target = $region16
        $region15: #{tpu_custom_call.1} parent=11 // pred_region
          %p290 = scmp.lt.s32.totalorder %s28, 0
          %s291 = scalar_select %p290, %s28, 0
          %s292 = smul.addr %s291, 3
          %s293 = smul.addr %s292, 8
          %s294 = scalar_lea.vmem %s1, %s293
        $region16: #{tpu_custom_call.1} parent=11 // pred_fallthru
          _
        // Predicated region
        $region17: #{tpu_custom_call.1} parent=11 // pred_check
          %p295 = pneg %p108
        $region18: #{tpu_custom_call.1} parent=11 // pred_check_branch
          %297 = sbr.rel (%p295) target = $region20
        $region19: #{tpu_custom_call.1} parent=11 // pred_region
          %p298 = scmp.lt.s32.totalorder %s28, 0
          %s299 = scalar_select %p298, %s28, 0
          %s300 = smul.addr %s299, 2
          %s301 = smul.addr %s300, 8
          %s302 = scalar_lea.vmem %s2, %s301
        $region20: #{tpu_custom_call.1} parent=11 // pred_fallthru
          _
        // Predicated region
        $region21: #{tpu_custom_call.1} parent=11 // pred_check
          %p303 = pneg %p129
        $region22: #{tpu_custom_call.1} parent=11 // pred_check_branch
          %305 = sbr.rel (%p303) target = $region24
        $region23: #{tpu_custom_call.1} parent=11 // pred_region
          _
        $region24: #{tpu_custom_call.1} parent=11 // pred_fallthru
          _
        // Predicated region
        $region25: #{tpu_custom_call.1} parent=11 // pred_check
          %p306 = pneg %p150
        $region26: #{tpu_custom_call.1} parent=11 // pred_check_branch
          %308 = sbr.rel (%p306) target = $region28
        $region27: #{tpu_custom_call.1} parent=11 // pred_region
          _
        $region28: #{tpu_custom_call.1} parent=11 // pred_fallthru
          _
        // Predicated region
        $region29: #{tpu_custom_call.1} parent=11 // pred_check
          %p309 = pneg %p171
        $region30: #{tpu_custom_call.1} parent=11 // pred_check_branch
          %311 = sbr.rel (%p309) target = $region32
        $region31: #{tpu_custom_call.1} parent=11 // pred_region
          _
        $region32: #{tpu_custom_call.1} parent=11 // pred_fallthru
          _
        // Predicated region
        $region33: #{tpu_custom_call.1} parent=11 // pred_check
          %p312 = pneg %p192
        $region34: #{tpu_custom_call.1} parent=11 // pred_check_branch
          %314 = sbr.rel (%p312) target = $region36
        $region35: #{tpu_custom_call.1} parent=11 // pred_region
          _
        $region36: #{tpu_custom_call.1} parent=11 // pred_fallthru
          _
        // Predicated region
        $region37: #{tpu_custom_call.1} parent=11 // pred_check
          %p315 = pneg %p218
        $region38: #{tpu_custom_call.1} parent=11 // pred_check_branch
          %317 = sbr.rel (%p315) target = $region40
        $region39: #{tpu_custom_call.1} parent=11 // pred_region
          %p318 = scmp.lt.s32.totalorder %s28, 0
          %s319 = scalar_select %p318, %s28, 0
          %s320 = smul.addr %s319, 2
          %s321 = smul.addr %s320, 8
          %s322 = scalar_lea.vmem %s7, %s321
        $region40: #{tpu_custom_call.1} parent=11 // pred_fallthru
          _
        // Predicated region
        $region41: #{tpu_custom_call.1} parent=11 // pred_check
          %p323 = pneg %p244
        $region42: #{tpu_custom_call.1} parent=11 // pred_check_branch
          %325 = sbr.rel (%p323) target = $region44
        $region43: #{tpu_custom_call.1} parent=11 // pred_region
          %p326 = scmp.lt.s32.totalorder %s28, 0
          %s327 = scalar_select %p326, %s28, 0
          %s328 = smul.addr %s327, 2
          %s329 = smul.addr %s328, 8
          %s330 = scalar_lea.vmem %s8, %s329
        $region44: #{tpu_custom_call.1} parent=11 // pred_fallthru
          _
      $region12: #{tpu_custom_call.1} parent=5 // pred_fallthru
        _
      %p331 = scmp.lt.s32.totalorder %s18, 2
      // Predicated region
      $region45: #{tpu_custom_call.1} parent=5 // pred_check
        %p332 = pneg %p331
      $region46: #{tpu_custom_call.1} parent=5 // pred_check_branch
        %334 = sbr.rel (%p332) target = $region48
      $region47: #{tpu_custom_call.1} parent=5 // pred_region
        // Predicated region
        $region49: #{tpu_custom_call.1} parent=47 // pred_check
          %p335 = pneg %p50
        $region50: #{tpu_custom_call.1} parent=47 // pred_check_branch
          %337 = sbr.rel (%p335) target = $region52
        $region51: #{tpu_custom_call.1} parent=47 // pred_region
          %p338 = scmp.lt.s32.totalorder %s25, 1
          %s339 = scalar_select %p338, %s25, 1
          %s340 = smul.addr %s339, 4
          %s341 = smul.addr %s340, 8
          %s342 = scalar_lea.vmem %s0, %s341
        $region52: #{tpu_custom_call.1} parent=47 // pred_fallthru
          _
      $region48: #{tpu_custom_call.1} parent=5 // pred_fallthru
        _
      %p343 = scmp.le.s32.totalorder 1, %s18
      %p344 = scmp.lt.s32.totalorder %s18, 3
      %p345 = pnand %p343, %p344
      %p346 = pneg %p345
      // Predicated region
      $region53: #{tpu_custom_call.1} parent=5 // pred_check
        _
      $region54: #{tpu_custom_call.1} parent=5 // pred_check_branch
        %348 = sbr.rel (%p345) target = $region56
      $region55: #{tpu_custom_call.1} parent=5 // pred_region
        %s349 = ssub.s32 %s18, 1
        %p350 = scmp.lt.s32.totalorder %s27, 1
        %s351 = scalar_select %p350, %s27, 1
        %s352 = smul.addr %s351, 4
        %s353 = smul.addr %s352, 8
        %s354 = scalar_lea.vmem %s0, %s353
        %p355 = pneg %p56
        %p356 = pneg %p53
        %p357 = scmp.lt.s32.totalorder %s28, 0
        %s358 = scalar_select %p357, %s28, 0
        %s359 = smul.addr %s358, 3
        %s360 = smul.addr %s359, 8
        %s361 = scalar_lea.vmem %s1, %s360
        %p362 = pneg %p82
        %p363 = pneg %p79
        %p364 = scmp.lt.s32.totalorder %s28, 0
        %s365 = scalar_select %p364, %s28, 0
        %s366 = smul.addr %s365, 2
        %s367 = smul.addr %s366, 8
        %s368 = scalar_lea.vmem %s2, %s367
        %p369 = pneg %p108
        %p370 = pneg %p105
        %p371 = pneg %p129
        %p372 = pneg %p126
        %p373 = pneg %p150
        %p374 = pneg %p147
        %p375 = pneg %p171
        %p376 = pneg %p168
        %p377 = pneg %p192
        %p378 = pneg %p189
        %p379 = scmp.lt.s32.totalorder %s28, 0
        %s380 = scalar_select %p379, %s28, 0
        %s381 = smul.addr %s380, 2
        %s382 = smul.addr %s381, 8
        %s383 = scalar_lea.vmem %s7, %s382
        %p384 = pneg %p218
        %p385 = pneg %p215
        %p386 = scmp.lt.s32.totalorder %s28, 0
        %s387 = scalar_select %p386, %s28, 0
        %s388 = smul.addr %s387, 2
        %s389 = smul.addr %s388, 8
        %s390 = scalar_lea.vmem %s8, %s389
        %p391 = pneg %p244
        %p392 = pneg %p241
        %p393 = pneg %p272
        %p394 = pneg %p269
        %s395 = sand.u32 %s259, 1
        %s396 = scalar_lea.sflag [#allocation3], %s395
        %s397 = sand.u32 %s259, 1
        %s398 = smul.addr %s397, 32
        %s399 = scalar_lea.vmem [#allocation2], %s398
        %p400 = scmp.lt.s32.totalorder %s27, 1
        %s401 = scalar_select %p400, %s27, 1
        %s402 = smul.addr %s401, 4
        %s403 = smul.addr %s402, 8
        %s404 = scalar_lea.vmem %s0, %s403
        %p405 = scmp.lt.s32.totalorder %s28, 0
        %s406 = scalar_select %p405, %s28, 0
        %s407 = smul.addr %s406, 3
        %s408 = smul.addr %s407, 8
        %s409 = scalar_lea.vmem %s1, %s408
        %p410 = scmp.lt.s32.totalorder %s28, 0
        %s411 = scalar_select %p410, %s28, 0
        %s412 = smul.addr %s411, 2
        %s413 = smul.addr %s412, 8
        %s414 = scalar_lea.vmem %s2, %s413
        %p415 = scmp.lt.s32.totalorder %s28, 0
        %s416 = scalar_select %p415, %s28, 0
        %s417 = smul.addr %s416, 2
        %s418 = smul.addr %s417, 8
        %s419 = scalar_lea.vmem %s7, %s418
        %p420 = scmp.lt.s32.totalorder %s28, 0
        %s421 = scalar_select %p420, %s28, 0
        %s422 = smul.addr %s421, 2
        %s423 = smul.addr %s422, 8
        %s424 = scalar_lea.vmem %s8, %s423
        %s425 = smul.u32 2, %s28
        %v426 = vld [vmem:[%s404] sm:$0xff]
        %v427 = vld [vmem:[%s404 + $0x8] sm:$0xff]
        %v428 = vld [vmem:[%s404 + $0x10] sm:$0xff]
        %v429 = vld [vmem:[%s404 + $0x18] sm:$0xff]
        %v430 = vld [vmem:[%s409] sm:$0xff]
        %v431 = vld [vmem:[%s409 + $0x8] sm:$0xff]
        %v432 = vld [vmem:[%s409 + $0x10] sm:$0xff]
        %vm433 = vcmask 130048
        %v435 = vsel %vm433, %v430, 0
        %v438 = vsel %vm433, %v431, 0
        %v441 = vsel %vm433, %v432, 0
        %443 = vmatprep.subr.mxu0 0.0
        %444 = vmatpush1.msra.mxu0 0.0
        %445 = vmatprep.subr.mxu0 0.0
        %446 = vmatpush1.msra.mxu0 0.0
        %447 = vmatprep.subr.mxu0 0.0
        %448 = vmatpush1.msra.mxu0 0.0
        %449 = vmatprep.subr.mxu0 0.0
        %450 = vmatpush1.msra.mxu0 0.0
        %451 = vmatprep.subr.mxu0 0.0
        %452 = vmatpush1.msra.mxu0 0.0
        %453 = vmatprep.subr.mxu0 0.0
        %454 = vmatpush1.msra.mxu0 0.0
        %455 = vmatprep.subr.mxu0 0.0
        %456 = vmatpush1.msra.mxu0 0.0
        %457 = vmatprep.subr.mxu0 0.0
        %458 = vmatpush1.msra.mxu0 0.0
        %459 = vmatprep.subr.mxu0 0.0
        %460 = vmatpush1.msra.mxu0 0.0
        %461 = vmatprep.subr.mxu0 0.0
        %462 = vmatpush1.msra.mxu0 0.0
        %463 = vmatprep.subr.mxu0 0.0
        %464 = vmatpush1.msra.mxu0 0.0
        %465 = vmatprep.subr.mxu0 0.0
        %466 = vmatpush1.msra.mxu0 0.0
        %467 = vmatprep.subr.mxu0 0.0
        %468 = vmatpush1.msra.mxu0 0.0
        %469 = vmatprep.subr.mxu0 0.0
        %470 = vmatpush1.msra.mxu0 0.0
        %471 = vmatprep.subr.mxu0 %v429
        %472 = vmatpush1.msra.mxu0 %v428
        %473 = vmatprep.subr.mxu0 %v427
        %474 = vmatpush1.msra.mxu0 %v426
        %475 = vmatprep.subr.mxu0 0.0
        %476 = vmatpush2.msra.mxu0 0.0
        %477 = vmatprep.subr.mxu0 0.0
        %478 = vmatpush2.msra.mxu0 0.0
        %479 = vmatprep.subr.mxu0 0.0
        %480 = vmatpush2.msra.mxu0 0.0
        %481 = vmatprep.subr.mxu0 0.0
        %482 = vmatpush2.msra.mxu0 0.0
        %483 = vmatprep.subr.mxu0 0.0
        %484 = vmatpush2.msra.mxu0 0.0
        %485 = vmatprep.subr.mxu0 0.0
        %486 = vmatpush2.msra.mxu0 0.0
        %487 = vmatprep.subr.mxu0 0.0
        %488 = vmatpush2.msra.mxu0 0.0
        %489 = vmatprep.subr.mxu0 0.0
        %490 = vmatpush2.msra.mxu0 0.0
        %491 = vmatprep.subr.mxu0 0.0
        %492 = vmatpush2.msra.mxu0 0.0
        %493 = vmatprep.subr.mxu0 0.0
        %494 = vmatpush2.msra.mxu0 0.0
        %495 = vmatprep.subr.mxu0 0.0
        %496 = vmatpush2.msra.mxu0 0.0
        %497 = vmatprep.subr.mxu0 0.0
        %498 = vmatpush2.msra.mxu0 0.0
        %499 = vmatprep.subr.mxu0 0.0
        %500 = vmatpush2.msra.mxu0 0.0
        %501 = vmatprep.subr.mxu0 0.0
        %502 = vmatpush2.msra.mxu0 0.0
        %503 = vmatprep.subr.mxu0 0.0
        %504 = vmatpush2.msra.mxu0 0.0
        %505 = vmatprep.subr.mxu0 0.0
        %506 = vmatpush2.msra.mxu0 0.0
        %507 = vmatprep.mubr.f32.mxu0 0.0
        %508 = vmatmul.mubr.f32.gmra.mxu0 %v435
        %v509 = vpop.f32.mrf.mxu0
        %v510 = vadd.f32 0.0, %v509
        %v511 = vpop.f32.mrf.mxu0
        %v512 = vadd.f32 0.0, %v511
        %513 = vmatprep.mubr.f32.mxu0 0.0
        %514 = vmatmul.mubr.f32.gmra.mxu0 %v438
        %v515 = vpop.f32.mrf.mxu0
        %v516 = vadd.f32 0.0, %v515
        %v517 = vpop.f32.mrf.mxu0
        %v518 = vadd.f32 0.0, %v517
        %519 = vmatprep.mubr.f32.mxu0 0.0
        %520 = vmatmul.mubr.f32.gmra.mxu0 %v441
        %v521 = vpop.f32.mrf.mxu0
        %v522 = vadd.f32 0.0, %v521
        %v523 = vpop.f32.mrf.mxu0
        %v524 = vadd.f32 0.0, %v523
        %525 = vdwg.mxu0
        %v526 = vadd.f32 %v522, %v524
        %527 = vadd.xlane.f32.xlu0 %v526
        %v528 = vpop.xlane.xlu0 %527
        %v529 = vmul.f32 %v516, %v522
        %v530 = vmul.f32 %v518, %v524
        %v531 = vadd.f32 %v529, %v530
        %532 = vadd.xlane.f32.xlu0 %v531
        %v533 = vpop.xlane.xlu0 %532
        %v534 = vmul.f32 %v516, %v516
        %v535 = vmul.f32 %v518, %v518
        %v536 = vmul.f32 %v534, %v522
        %v537 = vmul.f32 %v535, %v524
        %v538 = vadd.f32 %v536, %v537
        %539 = vadd.xlane.f32.xlu0 %v538
        %v540 = vpop.xlane.xlu0 %539
        %v541 = vmul.f32 %v534, %v516
        %v542 = vmul.f32 %v535, %v518
        %v543 = vmul.f32 %v541, %v522
        %v544 = vmul.f32 %v542, %v524
        %v545 = vadd.f32 %v543, %v544
        %546 = vadd.xlane.f32.xlu0 %v545
        %v547 = vpop.xlane.xlu0 %546
        %vm548 = vcmask 7168
        %v549 = vsel %vm548, %v528, %v533
        %vm550 = vcmask 15360
        %v551 = vsel %vm550, %v549, %v540
        %vm552 = vcmask 23552
        %v553 = vsel %vm552, %v551, %v547
        %v554 = vld [vmem:[%s4] sm:$0xf]
        %vm555 = vcmask 64512
        %v557 = vsel %vm555, %v554, 0
        %559 = vmatprep.subr.mxu0 0.0
        %560 = vmatpush1.msra.mxu0 0.0
        %561 = vmatprep.subr.mxu0 0.0
        %562 = vmatpush1.msra.mxu0 0.0
        %563 = vmatprep.subr.mxu0 0.0
        %564 = vmatpush1.msra.mxu0 0.0
        %565 = vmatprep.subr.mxu0 0.0
        %566 = vmatpush1.msra.mxu0 0.0
        %567 = vmatprep.subr.mxu0 0.0
        %568 = vmatpush1.msra.mxu0 0.0
        %569 = vmatprep.subr.mxu0 0.0
        %570 = vmatpush1.msra.mxu0 0.0
        %571 = vmatprep.subr.mxu0 0.0
        %572 = vmatpush1.msra.mxu0 0.0
        %573 = vmatprep.subr.mxu0 0.0
        %574 = vmatpush1.msra.mxu0 0.0
        %575 = vmatprep.subr.mxu0 0.0
        %576 = vmatpush1.msra.mxu0 0.0
        %577 = vmatprep.subr.mxu0 0.0
        %578 = vmatpush1.msra.mxu0 0.0
        %579 = vmatprep.subr.mxu0 0.0
        %580 = vmatpush1.msra.mxu0 0.0
        %581 = vmatprep.subr.mxu0 0.0
        %582 = vmatpush1.msra.mxu0 0.0
        %583 = vmatprep.subr.mxu0 0.0
        %584 = vmatpush1.msra.mxu0 0.0
        %585 = vmatprep.subr.mxu0 0.0
        %586 = vmatpush1.msra.mxu0 0.0
        %587 = vmatprep.subr.mxu0 0.0
        %588 = vmatpush1.msra.mxu0 0.0
        %589 = vmatprep.subr.mxu0 0.0
        %590 = vmatpush1.msra.mxu0 %v553
        %591 = vmatprep.subr.mxu0 0.0
        %592 = vmatpush2.msra.mxu0 0.0
        %593 = vmatprep.subr.mxu0 0.0
        %594 = vmatpush2.msra.mxu0 0.0
        %595 = vmatprep.subr.mxu0 0.0
        %596 = vmatpush2.msra.mxu0 0.0
        %597 = vmatprep.subr.mxu0 0.0
        %598 = vmatpush2.msra.mxu0 0.0
        %599 = vmatprep.subr.mxu0 0.0
        %600 = vmatpush2.msra.mxu0 0.0
        %601 = vmatprep.subr.mxu0 0.0
        %602 = vmatpush2.msra.mxu0 0.0
        %603 = vmatprep.subr.mxu0 0.0
        %604 = vmatpush2.msra.mxu0 0.0
        %605 = vmatprep.subr.mxu0 0.0
        %606 = vmatpush2.msra.mxu0 0.0
        %607 = vmatprep.subr.mxu0 0.0
        %608 = vmatpush2.msra.mxu0 0.0
        %609 = vmatprep.subr.mxu0 0.0
        %610 = vmatpush2.msra.mxu0 0.0
        %611 = vmatprep.subr.mxu0 0.0
        %612 = vmatpush2.msra.mxu0 0.0
        %613 = vmatprep.subr.mxu0 0.0
        %614 = vmatpush2.msra.mxu0 0.0
        %615 = vmatprep.subr.mxu0 0.0
        %616 = vmatpush2.msra.mxu0 0.0
        %617 = vmatprep.subr.mxu0 0.0
        %618 = vmatpush2.msra.mxu0 0.0
        %619 = vmatprep.subr.mxu0 0.0
        %620 = vmatpush2.msra.mxu0 0.0
        %621 = vmatprep.subr.mxu0 0.0
        %622 = vmatpush2.msra.mxu0 0.0
        %623 = vmatprep.mubr.f32.mxu0 0.0
        %624 = vmatmul.mubr.f32.gmra.mxu0 %v557
        %v625 = vpop.f32.mrf.mxu0
        %v626 = vadd.f32 0.0, %v625
        %v627 = vpop.f32.mrf.mxu0
        %628 = vdwg.mxu0
        %v629 = vld [vmem:[%s3] sm:$0xff]
        %vm630 = vcmask 31744
        %v632 = vsel %vm630, %v629, 0
        %vm634 = vcmask 1043456
        %v636 = vsel %vm634, %v626, 0
        %638 = vmatprep.subr.mxu0 0.0
        %639 = vmatpush1.msra.mxu0 0.0
        %640 = vmatprep.subr.mxu0 0.0
        %641 = vmatpush1.msra.mxu0 0.0
        %642 = vmatprep.subr.mxu0 0.0
        %643 = vmatpush1.msra.mxu0 0.0
        %644 = vmatprep.subr.mxu0 0.0
        %645 = vmatpush1.msra.mxu0 0.0
        %646 = vmatprep.subr.mxu0 0.0
        %647 = vmatpush1.msra.mxu0 0.0
        %648 = vmatprep.subr.mxu0 0.0
        %649 = vmatpush1.msra.mxu0 0.0
        %650 = vmatprep.subr.mxu0 0.0
        %651 = vmatpush1.msra.mxu0 0.0
        %652 = vmatprep.subr.mxu0 0.0
        %653 = vmatpush1.msra.mxu0 0.0
        %654 = vmatprep.subr.mxu0 0.0
        %655 = vmatpush1.msra.mxu0 0.0
        %656 = vmatprep.subr.mxu0 0.0
        %657 = vmatpush1.msra.mxu0 0.0
        %658 = vmatprep.subr.mxu0 0.0
        %659 = vmatpush1.msra.mxu0 0.0
        %660 = vmatprep.subr.mxu0 0.0
        %661 = vmatpush1.msra.mxu0 0.0
        %662 = vmatprep.subr.mxu0 0.0
        %663 = vmatpush1.msra.mxu0 0.0
        %664 = vmatprep.subr.mxu0 0.0
        %665 = vmatpush1.msra.mxu0 0.0
        %666 = vmatprep.subr.mxu0 0.0
        %667 = vmatpush1.msra.mxu0 0.0
        %668 = vmatprep.subr.mxu0 0.0
        %669 = vmatpush1.msra.mxu0 %v636
        %670 = vmatprep.subr.mxu0 0.0
        %671 = vmatpush2.msra.mxu0 0.0
        %672 = vmatprep.subr.mxu0 0.0
        %673 = vmatpush2.msra.mxu0 0.0
        %674 = vmatprep.subr.mxu0 0.0
        %675 = vmatpush2.msra.mxu0 0.0
        %676 = vmatprep.subr.mxu0 0.0
        %677 = vmatpush2.msra.mxu0 0.0
        %678 = vmatprep.subr.mxu0 0.0
        %679 = vmatpush2.msra.mxu0 0.0
        %680 = vmatprep.subr.mxu0 0.0
        %681 = vmatpush2.msra.mxu0 0.0
        %682 = vmatprep.subr.mxu0 0.0
        %683 = vmatpush2.msra.mxu0 0.0
        %684 = vmatprep.subr.mxu0 0.0
        %685 = vmatpush2.msra.mxu0 0.0
        %686 = vmatprep.subr.mxu0 0.0
        %687 = vmatpush2.msra.mxu0 0.0
        %688 = vmatprep.subr.mxu0 0.0
        %689 = vmatpush2.msra.mxu0 0.0
        %690 = vmatprep.subr.mxu0 0.0
        %691 = vmatpush2.msra.mxu0 0.0
        %692 = vmatprep.subr.mxu0 0.0
        %693 = vmatpush2.msra.mxu0 0.0
        %694 = vmatprep.subr.mxu0 0.0
        %695 = vmatpush2.msra.mxu0 0.0
        %696 = vmatprep.subr.mxu0 0.0
        %697 = vmatpush2.msra.mxu0 0.0
        %698 = vmatprep.subr.mxu0 0.0
        %699 = vmatpush2.msra.mxu0 0.0
        %700 = vmatprep.subr.mxu0 0.0
        %701 = vmatpush2.msra.mxu0 0.0
        %702 = vmatprep.mubr.f32.mxu0 0.0
        %703 = vmatmul.mubr.f32.gmra.mxu0 %v632
        %v704 = vpop.f32.mrf.mxu0
        %v705 = vadd.f32 0.0, %v704
        %v706 = vpop.f32.mrf.mxu0
        %707 = vdwg.mxu0
        %v708 = vmul.f32 %v705, 0.9998
        %710 = vset.pattern.permute.xlu0 0
        %711 = vperm.xlu0 %710, %v708
        %v712 = vpop.permute.xlu0 %711
        %v714 = vmul.f32 %v705, 0.00019996
        %716 = vset.pattern.permute.xlu0 1
        %717 = vperm.xlu0 %716, %v714
        %v718 = vpop.permute.xlu0 %717
        %v720 = vmul.f32 %v718, %v510
        %v721 = vmul.f32 %v718, %v512
        %v722 = vadd.f32 %v712, %v720
        %v723 = vadd.f32 %v712, %v721
        %v724 = vmul.f32 %v510, %v510
        %v725 = vmul.f32 %v512, %v512
        %v726 = vmul.f32 %v705, 1.9996e-08
        %728 = vset.pattern.permute.xlu0 2
        %729 = vperm.xlu0 %728, %v726
        %v730 = vpop.permute.xlu0 %729
        %v732 = vmul.f32 %v730, %v724
        %v733 = vmul.f32 %v730, %v725
        %v734 = vadd.f32 %v722, %v732
        %v735 = vadd.f32 %v723, %v733
        %v736 = vmul.f32 %v724, %v510
        %v737 = vmul.f32 %v725, %v512
        %v738 = vmul.f32 %v705, 1.3330667e-12
        %740 = vset.pattern.permute.xlu0 3
        %741 = vperm.xlu0 %740, %v738
        %v742 = vpop.permute.xlu0 %741
        %v744 = vmul.f32 %v742, %v736
        %v745 = vmul.f32 %v742, %v737
        %v746 = vadd.f32 %v734, %v744
        %v747 = vadd.f32 %v735, %v745
        %v748 = vld [vmem:[%s414] sm:$0xff]
        %v749 = vld [vmem:[%s414 + $0x8] sm:$0xff]
        %v751 = vsel %vm555, %v748, 0
        %v754 = vsel %vm555, %v749, 0
        %756 = vmatprep.subr.mxu0 0.0
        %757 = vmatpush1.msra.mxu0 0.0
        %758 = vmatprep.subr.mxu0 0.0
        %759 = vmatpush1.msra.mxu0 0.0
        %760 = vmatprep.subr.mxu0 0.0
        %761 = vmatpush1.msra.mxu0 0.0
        %762 = vmatprep.subr.mxu0 0.0
        %763 = vmatpush1.msra.mxu0 0.0
        %764 = vmatprep.subr.mxu0 0.0
        %765 = vmatpush1.msra.mxu0 0.0
        %766 = vmatprep.subr.mxu0 0.0
        %767 = vmatpush1.msra.mxu0 0.0
        %768 = vmatprep.subr.mxu0 0.0
        %769 = vmatpush1.msra.mxu0 0.0
        %770 = vmatprep.subr.mxu0 0.0
        %771 = vmatpush1.msra.mxu0 0.0
        %772 = vmatprep.subr.mxu0 0.0
        %773 = vmatpush1.msra.mxu0 0.0
        %774 = vmatprep.subr.mxu0 0.0
        %775 = vmatpush1.msra.mxu0 0.0
        %776 = vmatprep.subr.mxu0 0.0
        %777 = vmatpush1.msra.mxu0 0.0
        %778 = vmatprep.subr.mxu0 0.0
        %779 = vmatpush1.msra.mxu0 0.0
        %780 = vmatprep.subr.mxu0 0.0
        %781 = vmatpush1.msra.mxu0 0.0
        %782 = vmatprep.subr.mxu0 0.0
        %783 = vmatpush1.msra.mxu0 0.0
        %784 = vmatprep.subr.mxu0 0.0
        %785 = vmatpush1.msra.mxu0 0.0
        %786 = vmatprep.subr.mxu0 %v747
        %787 = vmatpush1.msra.mxu0 %v746
        %788 = vmatprep.subr.mxu0 0.0
        %789 = vmatpush2.msra.mxu0 0.0
        %790 = vmatprep.subr.mxu0 0.0
        %791 = vmatpush2.msra.mxu0 0.0
        %792 = vmatprep.subr.mxu0 0.0
        %793 = vmatpush2.msra.mxu0 0.0
        %794 = vmatprep.subr.mxu0 0.0
        %795 = vmatpush2.msra.mxu0 0.0
        %796 = vmatprep.subr.mxu0 0.0
        %797 = vmatpush2.msra.mxu0 0.0
        %798 = vmatprep.subr.mxu0 0.0
        %799 = vmatpush2.msra.mxu0 0.0
        %800 = vmatprep.subr.mxu0 0.0
        %801 = vmatpush2.msra.mxu0 0.0
        %802 = vmatprep.subr.mxu0 0.0
        %803 = vmatpush2.msra.mxu0 0.0
        %804 = vmatprep.subr.mxu0 0.0
        %805 = vmatpush2.msra.mxu0 0.0
        %806 = vmatprep.subr.mxu0 0.0
        %807 = vmatpush2.msra.mxu0 0.0
        %808 = vmatprep.subr.mxu0 0.0
        %809 = vmatpush2.msra.mxu0 0.0
        %810 = vmatprep.subr.mxu0 0.0
        %811 = vmatpush2.msra.mxu0 0.0
        %812 = vmatprep.subr.mxu0 0.0
        %813 = vmatpush2.msra.mxu0 0.0
        %814 = vmatprep.subr.mxu0 0.0
        %815 = vmatpush2.msra.mxu0 0.0
        %816 = vmatprep.subr.mxu0 0.0
        %817 = vmatpush2.msra.mxu0 0.0
        %818 = vmatprep.subr.mxu0 0.0
        %819 = vmatpush2.msra.mxu0 0.0
        %820 = vmatprep.mubr.f32.mxu0 0.0
        %821 = vmatmul.mubr.f32.gmra.mxu0 %v751
        %v822 = vpop.f32.mrf.mxu0
        %v823 = vadd.f32 0.0, %v822
        %v824 = vpop.f32.mrf.mxu0
        %v825 = vadd.f32 0.0, %v824
        %826 = vmatprep.mubr.f32.mxu0 0.0
        %827 = vmatmul.mubr.f32.gmra.mxu0 %v754
        %v828 = vpop.f32.mrf.mxu0
        %v829 = vadd.f32 0.0, %v828
        %v830 = vpop.f32.mrf.mxu0
        %v831 = vadd.f32 0.0, %v830
        %832 = vdwg.mxu0
        %v833 = vadd.f32 %v823, %v825
        %834 = vadd.xlane.f32.xlu0 %v833
        %v835 = vpop.xlane.xlu0 %834
        %v836 = vadd.f32 %v829, %v831
        %837 = vadd.xlane.f32.xlu0 %v836
        %v838 = vpop.xlane.xlu0 %837
        %v839 = vmul.f32 %v823, %v823
        %v840 = vmul.f32 %v825, %v825
        %v841 = vmul.f32 %v829, %v829
        %v842 = vmul.f32 %v831, %v831
        %v843 = vadd.f32 %v839, %v840
        %844 = vadd.xlane.f32.xlu0 %v843
        %v845 = vpop.xlane.xlu0 %844
        %v846 = vadd.f32 %v841, %v842
        %847 = vadd.xlane.f32.xlu0 %v846
        %v848 = vpop.xlane.xlu0 %847
        %v849 = vsel %vm548, %v835, %v845
        %v850 = vsel %vm548, %v838, %v848
        %v851 = vld [vmem:[%s6] sm:$0xf]
        %v853 = vsel %vm433, %v851, 0
        %855 = vmatprep.subr.mxu0 0.0
        %856 = vmatpush1.msra.mxu0 0.0
        %857 = vmatprep.subr.mxu0 0.0
        %858 = vmatpush1.msra.mxu0 0.0
        %859 = vmatprep.subr.mxu0 0.0
        %860 = vmatpush1.msra.mxu0 0.0
        %861 = vmatprep.subr.mxu0 0.0
        %862 = vmatpush1.msra.mxu0 0.0
        %863 = vmatprep.subr.mxu0 0.0
        %864 = vmatpush1.msra.mxu0 0.0
        %865 = vmatprep.subr.mxu0 0.0
        %866 = vmatpush1.msra.mxu0 0.0
        %867 = vmatprep.subr.mxu0 0.0
        %868 = vmatpush1.msra.mxu0 0.0
        %869 = vmatprep.subr.mxu0 0.0
        %870 = vmatpush1.msra.mxu0 0.0
        %871 = vmatprep.subr.mxu0 0.0
        %872 = vmatpush1.msra.mxu0 0.0
        %873 = vmatprep.subr.mxu0 0.0
        %874 = vmatpush1.msra.mxu0 0.0
        %875 = vmatprep.subr.mxu0 0.0
        %876 = vmatpush1.msra.mxu0 0.0
        %877 = vmatprep.subr.mxu0 0.0
        %878 = vmatpush1.msra.mxu0 0.0
        %879 = vmatprep.subr.mxu0 0.0
        %880 = vmatpush1.msra.mxu0 0.0
        %881 = vmatprep.subr.mxu0 0.0
        %882 = vmatpush1.msra.mxu0 0.0
        %883 = vmatprep.subr.mxu0 0.0
        %884 = vmatpush1.msra.mxu0 %v850
        %885 = vmatprep.subr.mxu0 0.0
        %886 = vmatpush1.msra.mxu0 %v849
        %887 = vmatprep.subr.mxu0 0.0
        %888 = vmatpush2.msra.mxu0 0.0
        %889 = vmatprep.subr.mxu0 0.0
        %890 = vmatpush2.msra.mxu0 0.0
        %891 = vmatprep.subr.mxu0 0.0
        %892 = vmatpush2.msra.mxu0 0.0
        %893 = vmatprep.subr.mxu0 0.0
        %894 = vmatpush2.msra.mxu0 0.0
        %895 = vmatprep.subr.mxu0 0.0
        %896 = vmatpush2.msra.mxu0 0.0
        %897 = vmatprep.subr.mxu0 0.0
        %898 = vmatpush2.msra.mxu0 0.0
        %899 = vmatprep.subr.mxu0 0.0
        %900 = vmatpush2.msra.mxu0 0.0
        %901 = vmatprep.subr.mxu0 0.0
        %902 = vmatpush2.msra.mxu0 0.0
        %903 = vmatprep.subr.mxu0 0.0
        %904 = vmatpush2.msra.mxu0 0.0
        %905 = vmatprep.subr.mxu0 0.0
        %906 = vmatpush2.msra.mxu0 0.0
        %907 = vmatprep.subr.mxu0 0.0
        %908 = vmatpush2.msra.mxu0 0.0
        %909 = vmatprep.subr.mxu0 0.0
        %910 = vmatpush2.msra.mxu0 0.0
        %911 = vmatprep.subr.mxu0 0.0
        %912 = vmatpush2.msra.mxu0 0.0
        %913 = vmatprep.subr.mxu0 0.0
        %914 = vmatpush2.msra.mxu0 0.0
        %915 = vmatprep.subr.mxu0 0.0
        %916 = vmatpush2.msra.mxu0 0.0
        %917 = vmatprep.subr.mxu0 0.0
        %918 = vmatpush2.msra.mxu0 0.0
        %919 = vmatprep.mubr.f32.mxu0 0.0
        %920 = vmatmul.mubr.f32.gmra.mxu0 %v853
        %v921 = vpop.f32.mrf.mxu0
        %v922 = vadd.f32 0.0, %v921
        %v923 = vpop.f32.mrf.mxu0
        %924 = vdwg.mxu0
        %v925 = vmul.f32 %v922, 0.0009765625
        %v926 = vmul.f32 %v925, %v925
        %928 = vrot.lane.b32.xlu0 %v926, 1
        %v929 = vpop.permute.xlu0 %928
        %v931 = vsub.f32 %v925, %v929
        %v932 = vmax.f32 %v931, 0.0
        %v933 = vadd.f32 %v932, 1e-05
        %v934 = vrsqrt.pop %v933
        %v935 = vld [vmem:[%s5] sm:$0xff]
        %v936 = vld [vmem:[%s5 + $0x8] sm:$0xff]
        %v937 = vsel %vm548, %v925, %v934
        %v939 = vsel %vm630, %v935, 0
        %v942 = vsel %vm630, %v936, 0
        %v945 = vsel %vm634, %v937, 0
        %947 = vmatprep.subr.mxu0 0.0
        %948 = vmatpush1.msra.mxu0 0.0
        %949 = vmatprep.subr.mxu0 0.0
        %950 = vmatpush1.msra.mxu0 0.0
        %951 = vmatprep.subr.mxu0 0.0
        %952 = vmatpush1.msra.mxu0 0.0
        %953 = vmatprep.subr.mxu0 0.0
        %954 = vmatpush1.msra.mxu0 0.0
        %955 = vmatprep.subr.mxu0 0.0
        %956 = vmatpush1.msra.mxu0 0.0
        %957 = vmatprep.subr.mxu0 0.0
        %958 = vmatpush1.msra.mxu0 0.0
        %959 = vmatprep.subr.mxu0 0.0
        %960 = vmatpush1.msra.mxu0 0.0
        %961 = vmatprep.subr.mxu0 0.0
        %962 = vmatpush1.msra.mxu0 0.0
        %963 = vmatprep.subr.mxu0 0.0
        %964 = vmatpush1.msra.mxu0 0.0
        %965 = vmatprep.subr.mxu0 0.0
        %966 = vmatpush1.msra.mxu0 0.0
        %967 = vmatprep.subr.mxu0 0.0
        %968 = vmatpush1.msra.mxu0 0.0
        %969 = vmatprep.subr.mxu0 0.0
        %970 = vmatpush1.msra.mxu0 0.0
        %971 = vmatprep.subr.mxu0 0.0
        %972 = vmatpush1.msra.mxu0 0.0
        %973 = vmatprep.subr.mxu0 0.0
        %974 = vmatpush1.msra.mxu0 0.0
        %975 = vmatprep.subr.mxu0 0.0
        %976 = vmatpush1.msra.mxu0 0.0
        %977 = vmatprep.subr.mxu0 0.0
        %978 = vmatpush1.msra.mxu0 %v945
        %979 = vmatprep.subr.mxu0 0.0
        %980 = vmatpush2.msra.mxu0 0.0
        %981 = vmatprep.subr.mxu0 0.0
        %982 = vmatpush2.msra.mxu0 0.0
        %983 = vmatprep.subr.mxu0 0.0
        %984 = vmatpush2.msra.mxu0 0.0
        %985 = vmatprep.subr.mxu0 0.0
        %986 = vmatpush2.msra.mxu0 0.0
        %987 = vmatprep.subr.mxu0 0.0
        %988 = vmatpush2.msra.mxu0 0.0
        %989 = vmatprep.subr.mxu0 0.0
        %990 = vmatpush2.msra.mxu0 0.0
        %991 = vmatprep.subr.mxu0 0.0
        %992 = vmatpush2.msra.mxu0 0.0
        %993 = vmatprep.subr.mxu0 0.0
        %994 = vmatpush2.msra.mxu0 0.0
        %995 = vmatprep.subr.mxu0 0.0
        %996 = vmatpush2.msra.mxu0 0.0
        %997 = vmatprep.subr.mxu0 0.0
        %998 = vmatpush2.msra.mxu0 0.0
        %999 = vmatprep.subr.mxu0 0.0
        %1000 = vmatpush2.msra.mxu0 0.0
        %1001 = vmatprep.subr.mxu0 0.0
        %1002 = vmatpush2.msra.mxu0 0.0
        %1003 = vmatprep.subr.mxu0 0.0
        %1004 = vmatpush2.msra.mxu0 0.0
        %1005 = vmatprep.subr.mxu0 0.0
        %1006 = vmatpush2.msra.mxu0 0.0
        %1007 = vmatprep.subr.mxu0 0.0
        %1008 = vmatpush2.msra.mxu0 0.0
        %1009 = vmatprep.subr.mxu0 0.0
        %1010 = vmatpush2.msra.mxu0 0.0
        %1011 = vmatprep.mubr.f32.mxu0 0.0
        %1012 = vmatmul.mubr.f32.gmra.mxu0 %v939
        %v1013 = vpop.f32.mrf.mxu0
        %v1014 = vadd.f32 0.0, %v1013
        %v1015 = vpop.f32.mrf.mxu0
        %1016 = vmatprep.mubr.f32.mxu0 0.0
        %1017 = vmatmul.mubr.f32.gmra.mxu0 %v942
        %v1018 = vpop.f32.mrf.mxu0
        %v1019 = vadd.f32 0.0, %v1018
        %v1020 = vpop.f32.mrf.mxu0
        %1021 = vdwg.mxu0
        %v1022 = vld [vmem:[%s419] sm:$0xff]
        %v1023 = vld [vmem:[%s419 + $0x8] sm:$0xff]
        %1026 = vrot.lane.b32.xlu0 %v1022, 1
        %v1027 = vpop.permute.xlu0 %1026
        %1028 = vrot.lane.b32.xlu0 %v1023, 1
        %v1029 = vpop.permute.xlu0 %1028
        %v1032 = vmul.f32 %v1014, %v1027
        %v1033 = vmul.f32 %v1019, %v1029
        %v1034 = vld [vmem:[%s424] sm:$0xff]
        %v1035 = vld [vmem:[%s424 + $0x8] sm:$0xff]
        %1038 = vrot.lane.b32.xlu0 %v1032, 127
        %v1039 = vpop.permute.xlu0 %1038
        %1040 = vrot.lane.b32.xlu0 %v1033, 127
        %v1041 = vpop.permute.xlu0 %1040
        %v1044 = vmul.f32 %v1014, %v1039
        %v1045 = vmul.f32 %v1019, %v1041
        %v1046 = vsub.f32 %v1034, %v1044
        %v1047 = vsub.f32 %v1035, %v1045
        %1048 = vset.pattern.permute.xlu0 1
        %1049 = vperm.xlu0 %1048, %v1032
        %v1050 = vpop.permute.xlu0 %1049
        %1052 = vset.pattern.permute.xlu0 1
        %1053 = vperm.xlu0 %1052, %v1033
        %v1054 = vpop.permute.xlu0 %1053
        %v1056 = vmul.f32 %v823, %v1050
        %v1057 = vmul.f32 %v825, %v1050
        %v1058 = vmul.f32 %v829, %v1054
        %v1059 = vmul.f32 %v831, %v1054
        %1061 = vset.pattern.permute.xlu0 0
        %1062 = vperm.xlu0 %1061, %v1046
        %v1063 = vpop.permute.xlu0 %1062
        %1066 = vset.pattern.permute.xlu0 0
        %1067 = vperm.xlu0 %1066, %v1047
        %v1068 = vpop.permute.xlu0 %1067
        %v1070 = vadd.f32 %v1056, %v1063
        %v1071 = vadd.f32 %v1057, %v1063
        %v1072 = vadd.f32 %v1058, %v1068
        %v1073 = vadd.f32 %v1059, %v1068
        %v1074 = vadd.f32 %v1070, %v426
        %v1075 = vadd.f32 %v1071, %v427
        %v1076 = vadd.f32 %v1072, %v428
        %v1077 = vadd.f32 %v1073, %v429
        %1078 = vst [vmem:[%s399] sm:$0xff] %v1074
        %1079 = vst [vmem:[%s399 + $0x8] sm:$0xff] %v1075
        %1080 = vst [vmem:[%s399 + $0x10] sm:$0xff] %v1076
        %1081 = vst [vmem:[%s399 + $0x18] sm:$0xff] %v1077
        %s1082 = sand.u32 %s259, 1
        %s1083 = scalar_lea.sflag [#allocation3], %s1082
        %s1084 = sand.u32 %s259, 1
        %s1085 = smul.addr %s1084, 32
        %s1086 = scalar_lea.vmem [#allocation2], %s1085
        // Predicated region
        $region57: #{tpu_custom_call.1} parent=55 // pred_check
          %p1087 = pneg %p269
        $region58: #{tpu_custom_call.1} parent=55 // pred_check_branch
          %1089 = sbr.rel (%p1087) target = $region60
        $region59: #{tpu_custom_call.1} parent=55 // pred_region
          %s1090 = smul.u32 2, %s28
          %s1092 = ssub.s32 512, 512
          %1093 = vsyncadd %s1083, %s1092
          %s1094 = smul.addr %s1090, 2
          %s1095 = smul.addr %s27, 4
          %s1096 = sadd.s32 %s1094, %s1095
          %s1097 = smul.addr %s1096, 128
          %s1098 = scalar_lea.hbm %s9, %s1097
          %s1099 = sshll.u32 %s1086, 4
          %s1100 = int_to_ptr.vmem [resolvable:$true] %s1099
          %1105 = dma.vmem_to_hbm [thread:$0]  %s1100, 512, %s1098, %s1083, 256, 256, 16
        $region60: #{tpu_custom_call.1} parent=55 // pred_fallthru
          _
      $region56: #{tpu_custom_call.1} parent=5 // pred_fallthru
        _
      %p1106 = scmp.le.s32.totalorder 2, %s18
      // Predicated region
      $region61: #{tpu_custom_call.1} parent=5 // pred_check
        %p1107 = pneg %p1106
      $region62: #{tpu_custom_call.1} parent=5 // pred_check_branch
        %1109 = sbr.rel (%p1107) target = $region64
      $region63: #{tpu_custom_call.1} parent=5 // pred_region
        %s1110 = ssub.s32 %s18, 2
        // Predicated region
        $region65: #{tpu_custom_call.1} parent=63 // pred_check
          %p1111 = pneg %p275
        $region66: #{tpu_custom_call.1} parent=63 // pred_check_branch
          %1113 = sbr.rel (%p1111) target = $region68
        $region67: #{tpu_custom_call.1} parent=63 // pred_region
          %s1114 = sand.u32 %s260, 1
          %s1115 = scalar_lea.sflag [#allocation3], %s1114
          %s1116 = sand.u32 %s260, 1
          %s1117 = smul.addr %s1116, 32
          %s1118 = scalar_lea.vmem [#allocation2], %s1117
          %1119 = dma.done %s1115, 512
        $region68: #{tpu_custom_call.1} parent=63 // pred_fallthru
          _
      $region64: #{tpu_custom_call.1} parent=5 // pred_fallthru
        _
    $region6: #{tpu_custom_call.1} parent=1 // loop_footer
      %s22 = sadd.s32 1, %s18
    $region7: #{tpu_custom_call.1} parent=1 // loop_footer_branch
      %17 = sbr.rel target = $region3
    $region8: #{tpu_custom_call.1} parent=1 // loop_exit
      _
    %1120 = vsyncpa [#allocation3], 1
    %s1121 = scalar_lea.sflag [#allocation3], 1
    %1122 = vsyncpa %s1121, 1

// kernel: tpu_custom_call.1
$region0: #{tpu_custom_call.1}
  #allocation0 [shape = 'u32[]', space=smem, size = 0x4, offset = 0x4, fixed_abs, tag = 'smem constant byte address 0x4 - core index']
  #allocation1 [shape = 'u32[144,128]{1,0:T(1,128)}', space=vmem, size = 0x12000, scoped, tag = 'internal scratch']
  %s0 = inlined_call_operand.vmem [shape: f32[2,16,256], index: 0, kind: input, shape index: {}]
  %s1 = inlined_call_operand.vmem [shape: f32[1,24,16], index: 1, kind: input, shape index: {}]
  %s2 = inlined_call_operand.vmem [shape: f32[1,16,8], index: 2, kind: input, shape index: {}]
  %s3 = inlined_call_operand.vmem [shape: f32[8,4], index: 3, kind: input, shape index: {}]
  %s4 = inlined_call_operand.vmem [shape: f32[4,8], index: 4, kind: input, shape index: {}]
  %s5 = inlined_call_operand.vmem [shape: f32[16,4], index: 5, kind: input, shape index: {}]
  %s6 = inlined_call_operand.vmem [shape: f32[4,16], index: 6, kind: input, shape index: {}]
  %s7 = inlined_call_operand.vmem [shape: f32[1,16,1], index: 7, kind: input, shape index: {}]
  %s8 = inlined_call_operand.vmem [shape: f32[1,16,1], index: 8, kind: input, shape index: {}]
  %s9 = inlined_call_operand.hbm [shape: f32[2,16,256], index: 9, kind: output, shape index: {}]
  %s10 = sld [smem:[#allocation0]]
  $region69: #{tpu_custom_call.1} parent=0
    _
  %s12 = ssub.s32 1, %s10
  %s13 = scalar_select 0, %s12, %s10
  $region1: #{tpu_custom_call.1} parent=0
    #allocation2 [shape = 'u8[32768]{0}', space=vmem, size = 0x8000, scoped, tag = 'output window, operand 0']
    #allocation3 [shape = 's32[2]{0}', space=sflag, size = 0x8, scoped, tag = 'scoped memory for tpu_custom_call.1']
    %14 = vsyncpa [#allocation3], 0
    %s15 = scalar_lea.sflag [#allocation3], 1
    %16 = vsyncpa %s15, 0
    loop: start=0, step=1, limit=4
    $region2: #{tpu_custom_call.1} parent=1 // loop_pre_header
      _
    $region3: #{tpu_custom_call.1} parent=1 // loop_header
      %s18 = sphi 0, %s22
      %p19 = scmp.ge.s32.totalorder %s18, 4
      %s25 = sphi 0, %s37
      %s26 = sphi 0, %s33
      %s27 = sphi 0, %s25
      %s28 = sphi 0, %s26
      %s29 = sphi 0, %s27
      %s30 = sphi 0, %s28
      %s40 = sphi 0, %s42
      %s43 = sphi 0, %s40
      %s44 = sphi 0, %s43
      %s60 = sphi 0, %s44
      %s66 = sphi 0, %s68
      %s69 = sphi 0, %s66
      %s70 = sphi 0, %s69
      %s86 = sphi 0, %s70
      %s92 = sphi 0, %s94
      %s95 = sphi 0, %s92
      %s96 = sphi 0, %s95
      %s112 = sphi 0, %s96
      %s116 = sphi 0, %s116
      %s118 = sphi 0, %s116
      %s119 = sphi 0, %s118
      %s133 = sphi 0, %s119
      %s137 = sphi 0, %s137
      %s139 = sphi 0, %s137
      %s140 = sphi 0, %s139
      %s154 = sphi 0, %s140
      %s158 = sphi 0, %s158
      %s160 = sphi 0, %s158
      %s161 = sphi 0, %s160
      %s175 = sphi 0, %s161
      %s179 = sphi 0, %s179
      %s181 = sphi 0, %s179
      %s182 = sphi 0, %s181
      %s196 = sphi 0, %s182
      %s202 = sphi 0, %s204
      %s205 = sphi 0, %s202
      %s206 = sphi 0, %s205
      %s222 = sphi 0, %s206
      %s228 = sphi 0, %s230
      %s231 = sphi 0, %s228
      %s232 = sphi 0, %s231
      %s248 = sphi 0, %s232
      %s256 = sphi 0, %s258
      %s259 = sphi 0, %s256
      %s260 = sphi 0, %s259
      %s276 = sphi 0, %s260
    $region4: #{tpu_custom_call.1} parent=1 // loop_header_branch
      %21 = sbr.rel (%p19) target = $region8
    $region5: #{tpu_custom_call.1} parent=1 // loop_body
      %s23 = ssub.s32 %s18, 1
      %s24 = ssub.s32 %s18, 2
      %s31 = sadd.s32 1, %s26
      %p32 = scmp.ge.s32.totalorder %s31, 1
      %s33 = scalar_select %p32, 0, %s31
      %s34 = sadd.s32 1, %s25
      %s35 = scalar_select %p32, %s34, %s25
      %p36 = scmp.ge.s32.totalorder %s35, 2
      %s37 = scalar_select %p36, 0, %s35
      %s38 = ssub.s32 %s25, %s37
      %p39 = scmp.eq.s32.totalorder %s38, 0
      %s41 = sadd.s32 %s40, 1
      %s42 = scalar_select %p39, %s40, %s41
      %p45 = pneg %p39
      %p46 = scmp.eq.s32.totalorder %s18, 1
      %p47 = por %p45, %p46
      %p48 = scmp.ne.s32.totalorder %s40, %s43
      %p49 = scmp.eq.s32.totalorder %s18, 0
      %p50 = por %p48, %p49
      %p51 = scmp.ne.s32.totalorder %s40, %s43
      %p52 = scmp.eq.s32.totalorder %s23, 1
      %p53 = por %p51, %p52
      %p54 = scmp.ne.s32.totalorder %s43, %s44
      %p55 = scmp.eq.s32.totalorder %s23, 0
      %p56 = por %p54, %p55
      %p57 = scmp.ne.s32.totalorder %s43, %s44
      %p58 = scmp.eq.s32.totalorder %s24, 1
      %p59 = por %p57, %p58
      %p61 = scmp.ne.s32.totalorder %s44, %s60
      %p62 = scmp.eq.s32.totalorder %s24, 0
      %p63 = por %p61, %p62
      %s64 = ssub.s32 %s26, %s33
      %p65 = scmp.eq.s32.totalorder %s64, 0
      %s67 = sadd.s32 %s66, 1
      %s68 = scalar_select %p65, %s66, %s67
      %p71 = pneg %p65
      %p72 = scmp.eq.s32.totalorder %s18, 1
      %p73 = por %p71, %p72
      %p74 = scmp.ne.s32.totalorder %s66, %s69
      %p75 = scmp.eq.s32.totalorder %s18, 0
      %p76 = por %p74, %p75
      %p77 = scmp.ne.s32.totalorder %s66, %s69
      %p78 = scmp.eq.s32.totalorder %s23, 1
      %p79 = por %p77, %p78
      %p80 = scmp.ne.s32.totalorder %s69, %s70
      %p81 = scmp.eq.s32.totalorder %s23, 0
      %p82 = por %p80, %p81
      %p83 = scmp.ne.s32.totalorder %s69, %s70
      %p84 = scmp.eq.s32.totalorder %s24, 1
      %p85 = por %p83, %p84
      %p87 = scmp.ne.s32.totalorder %s70, %s86
      %p88 = scmp.eq.s32.totalorder %s24, 0
      %p89 = por %p87, %p88
      %s90 = ssub.s32 %s26, %s33
      %p91 = scmp.eq.s32.totalorder %s90, 0
      %s93 = sadd.s32 %s92, 1
      %s94 = scalar_select %p91, %s92, %s93
      %p97 = pneg %p91
      %p98 = scmp.eq.s32.totalorder %s18, 1
      %p99 = por %p97, %p98
      %p100 = scmp.ne.s32.totalorder %s92, %s95
      %p101 = scmp.eq.s32.totalorder %s18, 0
      %p102 = por %p100, %p101
      %p103 = scmp.ne.s32.totalorder %s92, %s95
      %p104 = scmp.eq.s32.totalorder %s23, 1
      %p105 = por %p103, %p104
      %p106 = scmp.ne.s32.totalorder %s95, %s96
      %p107 = scmp.eq.s32.totalorder %s23, 0
      %p108 = por %p106, %p107
      %p109 = scmp.ne.s32.totalorder %s95, %s96
      %p110 = scmp.eq.s32.totalorder %s24, 1
      %p111 = por %p109, %p110
      %p113 = scmp.ne.s32.totalorder %s96, %s112
      %p114 = scmp.eq.s32.totalorder %s24, 0
      %p115 = por %p113, %p114
      %s117 = sadd.s32 %s116, 1
      %p120 = scmp.eq.s32.totalorder %s18, 1
      %p121 = scmp.ne.s32.totalorder %s116, %s118
      %p122 = scmp.eq.s32.totalorder %s18, 0
      %p123 = por %p121, %p122
      %p124 = scmp.ne.s32.totalorder %s116, %s118
      %p125 = scmp.eq.s32.totalorder %s23, 1
      %p126 = por %p124, %p125
      %p127 = scmp.ne.s32.totalorder %s118, %s119
      %p128 = scmp.eq.s32.totalorder %s23, 0
      %p129 = por %p127, %p128
      %p130 = scmp.ne.s32.totalorder %s118, %s119
      %p131 = scmp.eq.s32.totalorder %s24, 1
      %p132 = por %p130, %p131
      %p134 = scmp.ne.s32.totalorder %s119, %s133
      %p135 = scmp.eq.s32.totalorder %s24, 0
      %p136 = por %p134, %p135
      %s138 = sadd.s32 %s137, 1
      %p141 = scmp.eq.s32.totalorder %s18, 1
      %p142 = scmp.ne.s32.totalorder %s137, %s139
      %p143 = scmp.eq.s32.totalorder %s18, 0
      %p144 = por %p142, %p143
      %p145 = scmp.ne.s32.totalorder %s137, %s139
      %p146 = scmp.eq.s32.totalorder %s23, 1
      %p147 = por %p145, %p146
      %p148 = scmp.ne.s32.totalorder %s139, %s140
      %p149 = scmp.eq.s32.totalorder %s23, 0
      %p150 = por %p148, %p149
      %p151 = scmp.ne.s32.totalorder %s139, %s140
      %p152 = scmp.eq.s32.totalorder %s24, 1
      %p153 = por %p151, %p152
      %p155 = scmp.ne.s32.totalorder %s140, %s154
      %p156 = scmp.eq.s32.totalorder %s24, 0
      %p157 = por %p155, %p156
      %s159 = sadd.s32 %s158, 1
      %p162 = scmp.eq.s32.totalorder %s18, 1
      %p163 = scmp.ne.s32.totalorder %s158, %s160
      %p164 = scmp.eq.s32.totalorder %s18, 0
      %p165 = por %p163, %p164
      %p166 = scmp.ne.s32.totalorder %s158, %s160
      %p167 = scmp.eq.s32.totalorder %s23, 1
      %p168 = por %p166, %p167
      %p169 = scmp.ne.s32.totalorder %s160, %s161
      %p170 = scmp.eq.s32.totalorder %s23, 0
      %p171 = por %p169, %p170
      %p172 = scmp.ne.s32.totalorder %s160, %s161
      %p173 = scmp.eq.s32.totalorder %s24, 1
      %p174 = por %p172, %p173
      %p176 = scmp.ne.s32.totalorder %s161, %s175
      %p177 = scmp.eq.s32.totalorder %s24, 0
      %p178 = por %p176, %p177
      %s180 = sadd.s32 %s179, 1
      %p183 = scmp.eq.s32.totalorder %s18, 1
      %p184 = scmp.ne.s32.totalorder %s179, %s181
      %p185 = scmp.eq.s32.totalorder %s18, 0
      %p186 = por %p184, %p185
      %p187 = scmp.ne.s32.totalorder %s179, %s181
      %p188 = scmp.eq.s32.totalorder %s23, 1
      %p189 = por %p187, %p188
      %p190 = scmp.ne.s32.totalorder %s181, %s182
      %p191 = scmp.eq.s32.totalorder %s23, 0
      %p192 = por %p190, %p191
      %p193 = scmp.ne.s32.totalorder %s181, %s182
      %p194 = scmp.eq.s32.totalorder %s24, 1
      %p195 = por %p193, %p194
      %p197 = scmp.ne.s32.totalorder %s182, %s196
      %p198 = scmp.eq.s32.totalorder %s24, 0
      %p199 = por %p197, %p198
      %s200 = ssub.s32 %s26, %s33
      %p201 = scmp.eq.s32.totalorder %s200, 0
      %s203 = sadd.s32 %s202, 1
      %s204 = scalar_select %p201, %s202, %s203
      %p207 = pneg %p201
      %p208 = scmp.eq.s32.totalorder %s18, 1
      %p209 = por %p207, %p208
      %p210 = scmp.ne.s32.totalorder %s202, %s205
      %p211 = scmp.eq.s32.totalorder %s18, 0
      %p212 = por %p210, %p211
      %p213 = scmp.ne.s32.totalorder %s202, %s205
      %p214 = scmp.eq.s32.totalorder %s23, 1
      %p215 = por %p213, %p214
      %p216 = scmp.ne.s32.totalorder %s205, %s206
      %p217 = scmp.eq.s32.totalorder %s23, 0
      %p218 = por %p216, %p217
      %p219 = scmp.ne.s32.totalorder %s205, %s206
      %p220 = scmp.eq.s32.totalorder %s24, 1
      %p221 = por %p219, %p220
      %p223 = scmp.ne.s32.totalorder %s206, %s222
      %p224 = scmp.eq.s32.totalorder %s24, 0
      %p225 = por %p223, %p224
      %s226 = ssub.s32 %s26, %s33
      %p227 = scmp.eq.s32.totalorder %s226, 0
      %s229 = sadd.s32 %s228, 1
      %s230 = scalar_select %p227, %s228, %s229
      %p233 = pneg %p227
      %p234 = scmp.eq.s32.totalorder %s18, 1
      %p235 = por %p233, %p234
      %p236 = scmp.ne.s32.totalorder %s228, %s231
      %p237 = scmp.eq.s32.totalorder %s18, 0
      %p238 = por %p236, %p237
      %p239 = scmp.ne.s32.totalorder %s228, %s231
      %p240 = scmp.eq.s32.totalorder %s23, 1
      %p241 = por %p239, %p240
      %p242 = scmp.ne.s32.totalorder %s231, %s232
      %p243 = scmp.eq.s32.totalorder %s23, 0
      %p244 = por %p242, %p243
      %p245 = scmp.ne.s32.totalorder %s231, %s232
      %p246 = scmp.eq.s32.totalorder %s24, 1
      %p247 = por %p245, %p246
      %p249 = scmp.ne.s32.totalorder %s232, %s248
      %p250 = scmp.eq.s32.totalorder %s24, 0
      %p251 = por %p249, %p250
      %s252 = ssub.s32 %s25, %s37
      %s253 = ssub.s32 %s26, %s33
      %s254 = sor.u32 %s252, %s253
      %p255 = scmp.eq.s32.totalorder %s254, 0
      %s257 = sadd.s32 %s256, 1
      %s258 = scalar_select %p255, %s256, %s257
      %p261 = pneg %p255
      %p262 = scmp.eq.s32.totalorder %s18, 1
      %p263 = por %p261, %p262
      %p264 = scmp.ne.s32.totalorder %s256, %s259
      %p265 = scmp.eq.s32.totalorder %s18, 0
      %p266 = por %p264, %p265
      %p267 = scmp.ne.s32.totalorder %s256, %s259
      %p268 = scmp.eq.s32.totalorder %s23, 1
      %p269 = por %p267, %p268
      %p270 = scmp.ne.s32.totalorder %s259, %s260
      %p271 = scmp.eq.s32.totalorder %s23, 0
      %p272 = por %p270, %p271
      %p273 = scmp.ne.s32.totalorder %s259, %s260
      %p274 = scmp.eq.s32.totalorder %s24, 1
      %p275 = por %p273, %p274
      %p277 = scmp.ne.s32.totalorder %s260, %s276
      %p278 = scmp.eq.s32.totalorder %s24, 0
      %p279 = por %p277, %p278
      %p280 = scmp.le.s32.totalorder 1, %s18
      %p281 = scmp.lt.s32.totalorder %s18, 3
      %p282 = pnand %p280, %p281
      %p283 = pneg %p282
      // Predicated region
      $region9: #{tpu_custom_call.1} parent=5 // pred_check
        _
      $region10: #{tpu_custom_call.1} parent=5 // pred_check_branch
        %285 = sbr.rel (%p282) target = $region12
      $region11: #{tpu_custom_call.1} parent=5 // pred_region
        %s286 = ssub.s32 %s18, 1
        // Predicated region
        $region13: #{tpu_custom_call.1} parent=11 // pred_check
          %p287 = pneg %p82
        $region14: #{tpu_custom_call.1} parent=11 // pred_check_branch
          %289 = sbr.rel (%p287) target = $region16
        $region15: #{tpu_custom_call.1} parent=11 // pred_region
          %p290 = scmp.lt.s32.totalorder %s28, 0
          %s291 = scalar_select %p290, %s28, 0
          %s292 = smul.addr %s291, 3
          %s293 = smul.addr %s292, 8
          %s294 = scalar_lea.vmem %s1, %s293
        $region16: #{tpu_custom_call.1} parent=11 // pred_fallthru
          _
        // Predicated region
        $region17: #{tpu_custom_call.1} parent=11 // pred_check
          %p295 = pneg %p108
        $region18: #{tpu_custom_call.1} parent=11 // pred_check_branch
          %297 = sbr.rel (%p295) target = $region20
        $region19: #{tpu_custom_call.1} parent=11 // pred_region
          %p298 = scmp.lt.s32.totalorder %s28, 0
          %s299 = scalar_select %p298, %s28, 0
          %s300 = smul.addr %s299, 2
          %s301 = smul.addr %s300, 8
          %s302 = scalar_lea.vmem %s2, %s301
        $region20: #{tpu_custom_call.1} parent=11 // pred_fallthru
          _
        // Predicated region
        $region21: #{tpu_custom_call.1} parent=11 // pred_check
          %p303 = pneg %p129
        $region22: #{tpu_custom_call.1} parent=11 // pred_check_branch
          %305 = sbr.rel (%p303) target = $region24
        $region23: #{tpu_custom_call.1} parent=11 // pred_region
          _
        $region24: #{tpu_custom_call.1} parent=11 // pred_fallthru
          _
        // Predicated region
        $region25: #{tpu_custom_call.1} parent=11 // pred_check
          %p306 = pneg %p150
        $region26: #{tpu_custom_call.1} parent=11 // pred_check_branch
          %308 = sbr.rel (%p306) target = $region28
        $region27: #{tpu_custom_call.1} parent=11 // pred_region
          _
        $region28: #{tpu_custom_call.1} parent=11 // pred_fallthru
          _
        // Predicated region
        $region29: #{tpu_custom_call.1} parent=11 // pred_check
          %p309 = pneg %p171
        $region30: #{tpu_custom_call.1} parent=11 // pred_check_branch
          %311 = sbr.rel (%p309) target = $region32
        $region31: #{tpu_custom_call.1} parent=11 // pred_region
          _
        $region32: #{tpu_custom_call.1} parent=11 // pred_fallthru
          _
        // Predicated region
        $region33: #{tpu_custom_call.1} parent=11 // pred_check
          %p312 = pneg %p192
        $region34: #{tpu_custom_call.1} parent=11 // pred_check_branch
          %314 = sbr.rel (%p312) target = $region36
        $region35: #{tpu_custom_call.1} parent=11 // pred_region
          _
        $region36: #{tpu_custom_call.1} parent=11 // pred_fallthru
          _
        // Predicated region
        $region37: #{tpu_custom_call.1} parent=11 // pred_check
          %p315 = pneg %p218
        $region38: #{tpu_custom_call.1} parent=11 // pred_check_branch
          %317 = sbr.rel (%p315) target = $region40
        $region39: #{tpu_custom_call.1} parent=11 // pred_region
          %p318 = scmp.lt.s32.totalorder %s28, 0
          %s319 = scalar_select %p318, %s28, 0
          %s320 = smul.addr %s319, 2
          %s321 = smul.addr %s320, 8
          %s322 = scalar_lea.vmem %s7, %s321
        $region40: #{tpu_custom_call.1} parent=11 // pred_fallthru
          _
        // Predicated region
        $region41: #{tpu_custom_call.1} parent=11 // pred_check
          %p323 = pneg %p244
        $region42: #{tpu_custom_call.1} parent=11 // pred_check_branch
          %325 = sbr.rel (%p323) target = $region44
        $region43: #{tpu_custom_call.1} parent=11 // pred_region
          %p326 = scmp.lt.s32.totalorder %s28, 0
          %s327 = scalar_select %p326, %s28, 0
          %s328 = smul.addr %s327, 2
          %s329 = smul.addr %s328, 8
          %s330 = scalar_lea.vmem %s8, %s329
        $region44: #{tpu_custom_call.1} parent=11 // pred_fallthru
          _
      $region12: #{tpu_custom_call.1} parent=5 // pred_fallthru
        _
      %p331 = scmp.lt.s32.totalorder %s18, 2
      // Predicated region
      $region45: #{tpu_custom_call.1} parent=5 // pred_check
        %p332 = pneg %p331
      $region46: #{tpu_custom_call.1} parent=5 // pred_check_branch
        %334 = sbr.rel (%p332) target = $region48
      $region47: #{tpu_custom_call.1} parent=5 // pred_region
        // Predicated region
        $region49: #{tpu_custom_call.1} parent=47 // pred_check
          %p335 = pneg %p50
        $region50: #{tpu_custom_call.1} parent=47 // pred_check_branch
          %337 = sbr.rel (%p335) target = $region52
        $region51: #{tpu_custom_call.1} parent=47 // pred_region
          %p338 = scmp.lt.s32.totalorder %s25, 1
          %s339 = scalar_select %p338, %s25, 1
          %s340 = smul.addr %s339, 4
          %s341 = smul.addr %s340, 8
          %s342 = scalar_lea.vmem %s0, %s341
        $region52: #{tpu_custom_call.1} parent=47 // pred_fallthru
          _
      $region48: #{tpu_custom_call.1} parent=5 // pred_fallthru
        _
      %p343 = scmp.le.s32.totalorder 1, %s18
      %p344 = scmp.lt.s32.totalorder %s18, 3
      %p345 = pnand %p343, %p344
      %p346 = pneg %p345
      // Predicated region
      $region53: #{tpu_custom_call.1} parent=5 // pred_check
        _
      $region54: #{tpu_custom_call.1} parent=5 // pred_check_branch
        %348 = sbr.rel (%p345) target = $region56
      $region55: #{tpu_custom_call.1} parent=5 // pred_region
        %s349 = ssub.s32 %s18, 1
        %p350 = scmp.lt.s32.totalorder %s27, 1
        %s351 = scalar_select %p350, %s27, 1
        %s352 = smul.addr %s351, 4
        %s353 = smul.addr %s352, 8
        %s354 = scalar_lea.vmem %s0, %s353
        %p355 = pneg %p56
        %p356 = pneg %p53
        %p357 = scmp.lt.s32.totalorder %s28, 0
        %s358 = scalar_select %p357, %s28, 0
        %s359 = smul.addr %s358, 3
        %s360 = smul.addr %s359, 8
        %s361 = scalar_lea.vmem %s1, %s360
        %p362 = pneg %p82
        %p363 = pneg %p79
        %p364 = scmp.lt.s32.totalorder %s28, 0
        %s365 = scalar_select %p364, %s28, 0
        %s366 = smul.addr %s365, 2
        %s367 = smul.addr %s366, 8
        %s368 = scalar_lea.vmem %s2, %s367
        %p369 = pneg %p108
        %p370 = pneg %p105
        %p371 = pneg %p129
        %p372 = pneg %p126
        %p373 = pneg %p150
        %p374 = pneg %p147
        %p375 = pneg %p171
        %p376 = pneg %p168
        %p377 = pneg %p192
        %p378 = pneg %p189
        %p379 = scmp.lt.s32.totalorder %s28, 0
        %s380 = scalar_select %p379, %s28, 0
        %s381 = smul.addr %s380, 2
        %s382 = smul.addr %s381, 8
        %s383 = scalar_lea.vmem %s7, %s382
        %p384 = pneg %p218
        %p385 = pneg %p215
        %p386 = scmp.lt.s32.totalorder %s28, 0
        %s387 = scalar_select %p386, %s28, 0
        %s388 = smul.addr %s387, 2
        %s389 = smul.addr %s388, 8
        %s390 = scalar_lea.vmem %s8, %s389
        %p391 = pneg %p244
        %p392 = pneg %p241
        %p393 = pneg %p272
        %p394 = pneg %p269
        %s395 = sand.u32 %s259, 1
        %s396 = scalar_lea.sflag [#allocation3], %s395
        %s397 = sand.u32 %s259, 1
        %s398 = smul.addr %s397, 32
        %s399 = scalar_lea.vmem [#allocation2], %s398
        %p400 = scmp.lt.s32.totalorder %s27, 1
        %s401 = scalar_select %p400, %s27, 1
        %s402 = smul.addr %s401, 4
        %s403 = smul.addr %s402, 8
        %s404 = scalar_lea.vmem %s0, %s403
        %p405 = scmp.lt.s32.totalorder %s28, 0
        %s406 = scalar_select %p405, %s28, 0
        %s407 = smul.addr %s406, 3
        %s408 = smul.addr %s407, 8
        %s409 = scalar_lea.vmem %s1, %s408
        %p410 = scmp.lt.s32.totalorder %s28, 0
        %s411 = scalar_select %p410, %s28, 0
        %s412 = smul.addr %s411, 2
        %s413 = smul.addr %s412, 8
        %s414 = scalar_lea.vmem %s2, %s413
        %p415 = scmp.lt.s32.totalorder %s28, 0
        %s416 = scalar_select %p415, %s28, 0
        %s417 = smul.addr %s416, 2
        %s418 = smul.addr %s417, 8
        %s419 = scalar_lea.vmem %s7, %s418
        %p420 = scmp.lt.s32.totalorder %s28, 0
        %s421 = scalar_select %p420, %s28, 0
        %s422 = smul.addr %s421, 2
        %s423 = smul.addr %s422, 8
        %s424 = scalar_lea.vmem %s8, %s423
        %s425 = smul.u32 2, %s28
        %v426 = vld [vmem:[%s404] sm:$0xff]
        %v427 = vld [vmem:[%s404 + $0x8] sm:$0xff]
        %v428 = vld [vmem:[%s404 + $0x10] sm:$0xff]
        %v429 = vld [vmem:[%s404 + $0x18] sm:$0xff]
        %v430 = vld [vmem:[%s409] sm:$0xff]
        %v431 = vld [vmem:[%s409 + $0x8] sm:$0xff]
        %v432 = vld [vmem:[%s409 + $0x10] sm:$0xff]
        %vm433 = vcmask 130048
        %v435 = vsel %vm433, %v430, 0
        %v438 = vsel %vm433, %v431, 0
        %v441 = vsel %vm433, %v432, 0
        %443 = vmatprep.subr.mxu0 0.0
        %444 = vmatpush1.msra.mxu0 0.0
        %445 = vmatprep.subr.mxu0 0.0
        %446 = vmatpush1.msra.mxu0 0.0
        %447 = vmatprep.subr.mxu0 0.0
        %448 = vmatpush1.msra.mxu0 0.0
        %449 = vmatprep.subr.mxu0 0.0
        %450 = vmatpush1.msra.mxu0 0.0
        %451 = vmatprep.subr.mxu0 0.0
        %452 = vmatpush1.msra.mxu0 0.0
        %453 = vmatprep.subr.mxu0 0.0
        %454 = vmatpush1.msra.mxu0 0.0
        %455 = vmatprep.subr.mxu0 0.0
        %456 = vmatpush1.msra.mxu0 0.0
        %457 = vmatprep.subr.mxu0 0.0
        %458 = vmatpush1.msra.mxu0 0.0
        %459 = vmatprep.subr.mxu0 0.0
        %460 = vmatpush1.msra.mxu0 0.0
        %461 = vmatprep.subr.mxu0 0.0
        %462 = vmatpush1.msra.mxu0 0.0
        %463 = vmatprep.subr.mxu0 0.0
        %464 = vmatpush1.msra.mxu0 0.0
        %465 = vmatprep.subr.mxu0 0.0
        %466 = vmatpush1.msra.mxu0 0.0
        %467 = vmatprep.subr.mxu0 0.0
        %468 = vmatpush1.msra.mxu0 0.0
        %469 = vmatprep.subr.mxu0 0.0
        %470 = vmatpush1.msra.mxu0 0.0
        %471 = vmatprep.subr.mxu0 %v429
        %472 = vmatpush1.msra.mxu0 %v428
        %473 = vmatprep.subr.mxu0 %v427
        %474 = vmatpush1.msra.mxu0 %v426
        %475 = vmatprep.subr.mxu0 0.0
        %476 = vmatpush2.msra.mxu0 0.0
        %477 = vmatprep.subr.mxu0 0.0
        %478 = vmatpush2.msra.mxu0 0.0
        %479 = vmatprep.subr.mxu0 0.0
        %480 = vmatpush2.msra.mxu0 0.0
        %481 = vmatprep.subr.mxu0 0.0
        %482 = vmatpush2.msra.mxu0 0.0
        %483 = vmatprep.subr.mxu0 0.0
        %484 = vmatpush2.msra.mxu0 0.0
        %485 = vmatprep.subr.mxu0 0.0
        %486 = vmatpush2.msra.mxu0 0.0
        %487 = vmatprep.subr.mxu0 0.0
        %488 = vmatpush2.msra.mxu0 0.0
        %489 = vmatprep.subr.mxu0 0.0
        %490 = vmatpush2.msra.mxu0 0.0
        %491 = vmatprep.subr.mxu0 0.0
        %492 = vmatpush2.msra.mxu0 0.0
        %493 = vmatprep.subr.mxu0 0.0
        %494 = vmatpush2.msra.mxu0 0.0
        %495 = vmatprep.subr.mxu0 0.0
        %496 = vmatpush2.msra.mxu0 0.0
        %497 = vmatprep.subr.mxu0 0.0
        %498 = vmatpush2.msra.mxu0 0.0
        %499 = vmatprep.subr.mxu0 0.0
        %500 = vmatpush2.msra.mxu0 0.0
        %501 = vmatprep.subr.mxu0 0.0
        %502 = vmatpush2.msra.mxu0 0.0
        %503 = vmatprep.subr.mxu0 0.0
        %504 = vmatpush2.msra.mxu0 0.0
        %505 = vmatprep.subr.mxu0 0.0
        %506 = vmatpush2.msra.mxu0 0.0
        %507 = vmatprep.mubr.f32.mxu0 0.0
        %508 = vmatmul.mubr.f32.gmra.mxu0 %v435
        %v509 = vpop.f32.mrf.mxu0
        %v510 = vadd.f32 0.0, %v509
        %v511 = vpop.f32.mrf.mxu0
        %v512 = vadd.f32 0.0, %v511
        %513 = vmatprep.mubr.f32.mxu0 0.0
        %514 = vmatmul.mubr.f32.gmra.mxu0 %v438
        %v515 = vpop.f32.mrf.mxu0
        %v516 = vadd.f32 0.0, %v515
        %v517 = vpop.f32.mrf.mxu0
        %v518 = vadd.f32 0.0, %v517
        %519 = vmatprep.mubr.f32.mxu0 0.0
        %520 = vmatmul.mubr.f32.gmra.mxu0 %v441
        %v521 = vpop.f32.mrf.mxu0
        %v522 = vadd.f32 0.0, %v521
        %v523 = vpop.f32.mrf.mxu0
        %v524 = vadd.f32 0.0, %v523
        %525 = vdwg.mxu0
        %v526 = vadd.f32 %v522, %v524
        %527 = vadd.xlane.f32.xlu0 %v526
        %v528 = vpop.xlane.xlu0 %527
        %v529 = vmul.f32 %v516, %v522
        %v530 = vmul.f32 %v518, %v524
        %v531 = vadd.f32 %v529, %v530
        %532 = vadd.xlane.f32.xlu0 %v531
        %v533 = vpop.xlane.xlu0 %532
        %v534 = vmul.f32 %v516, %v516
        %v535 = vmul.f32 %v518, %v518
        %v536 = vmul.f32 %v534, %v522
        %v537 = vmul.f32 %v535, %v524
        %v538 = vadd.f32 %v536, %v537
        %539 = vadd.xlane.f32.xlu0 %v538
        %v540 = vpop.xlane.xlu0 %539
        %v541 = vmul.f32 %v534, %v516
        %v542 = vmul.f32 %v535, %v518
        %v543 = vmul.f32 %v541, %v522
        %v544 = vmul.f32 %v542, %v524
        %v545 = vadd.f32 %v543, %v544
        %546 = vadd.xlane.f32.xlu0 %v545
        %v547 = vpop.xlane.xlu0 %546
        %vm548 = vcmask 7168
        %v549 = vsel %vm548, %v528, %v533
        %vm550 = vcmask 15360
        %v551 = vsel %vm550, %v549, %v540
        %vm552 = vcmask 23552
        %v553 = vsel %vm552, %v551, %v547
        %v554 = vld [vmem:[%s4] sm:$0xf]
        %vm555 = vcmask 64512
        %v557 = vsel %vm555, %v554, 0
        %559 = vmatprep.subr.mxu0 0.0
        %560 = vmatpush1.msra.mxu0 0.0
        %561 = vmatprep.subr.mxu0 0.0
        %562 = vmatpush1.msra.mxu0 0.0
        %563 = vmatprep.subr.mxu0 0.0
        %564 = vmatpush1.msra.mxu0 0.0
        %565 = vmatprep.subr.mxu0 0.0
        %566 = vmatpush1.msra.mxu0 0.0
        %567 = vmatprep.subr.mxu0 0.0
        %568 = vmatpush1.msra.mxu0 0.0
        %569 = vmatprep.subr.mxu0 0.0
        %570 = vmatpush1.msra.mxu0 0.0
        %571 = vmatprep.subr.mxu0 0.0
        %572 = vmatpush1.msra.mxu0 0.0
        %573 = vmatprep.subr.mxu0 0.0
        %574 = vmatpush1.msra.mxu0 0.0
        %575 = vmatprep.subr.mxu0 0.0
        %576 = vmatpush1.msra.mxu0 0.0
        %577 = vmatprep.subr.mxu0 0.0
        %578 = vmatpush1.msra.mxu0 0.0
        %579 = vmatprep.subr.mxu0 0.0
        %580 = vmatpush1.msra.mxu0 0.0
        %581 = vmatprep.subr.mxu0 0.0
        %582 = vmatpush1.msra.mxu0 0.0
        %583 = vmatprep.subr.mxu0 0.0
        %584 = vmatpush1.msra.mxu0 0.0
        %585 = vmatprep.subr.mxu0 0.0
        %586 = vmatpush1.msra.mxu0 0.0
        %587 = vmatprep.subr.mxu0 0.0
        %588 = vmatpush1.msra.mxu0 0.0
        %589 = vmatprep.subr.mxu0 0.0
        %590 = vmatpush1.msra.mxu0 %v553
        %591 = vmatprep.subr.mxu0 0.0
        %592 = vmatpush2.msra.mxu0 0.0
        %593 = vmatprep.subr.mxu0 0.0
        %594 = vmatpush2.msra.mxu0 0.0
        %595 = vmatprep.subr.mxu0 0.0
        %596 = vmatpush2.msra.mxu0 0.0
        %597 = vmatprep.subr.mxu0 0.0
        %598 = vmatpush2.msra.mxu0 0.0
        %599 = vmatprep.subr.mxu0 0.0
        %600 = vmatpush2.msra.mxu0 0.0
        %601 = vmatprep.subr.mxu0 0.0
        %602 = vmatpush2.msra.mxu0 0.0
        %603 = vmatprep.subr.mxu0 0.0
        %604 = vmatpush2.msra.mxu0 0.0
        %605 = vmatprep.subr.mxu0 0.0
        %606 = vmatpush2.msra.mxu0 0.0
        %607 = vmatprep.subr.mxu0 0.0
        %608 = vmatpush2.msra.mxu0 0.0
        %609 = vmatprep.subr.mxu0 0.0
        %610 = vmatpush2.msra.mxu0 0.0
        %611 = vmatprep.subr.mxu0 0.0
        %612 = vmatpush2.msra.mxu0 0.0
        %613 = vmatprep.subr.mxu0 0.0
        %614 = vmatpush2.msra.mxu0 0.0
        %615 = vmatprep.subr.mxu0 0.0
        %616 = vmatpush2.msra.mxu0 0.0
        %617 = vmatprep.subr.mxu0 0.0
        %618 = vmatpush2.msra.mxu0 0.0
        %619 = vmatprep.subr.mxu0 0.0
        %620 = vmatpush2.msra.mxu0 0.0
        %621 = vmatprep.subr.mxu0 0.0
        %622 = vmatpush2.msra.mxu0 0.0
        %623 = vmatprep.mubr.f32.mxu0 0.0
        %624 = vmatmul.mubr.f32.gmra.mxu0 %v557
        %v625 = vpop.f32.mrf.mxu0
        %v626 = vadd.f32 0.0, %v625
        %v627 = vpop.f32.mrf.mxu0
        %628 = vdwg.mxu0
        %v629 = vld [vmem:[%s3] sm:$0xff]
        %vm630 = vcmask 31744
        %v632 = vsel %vm630, %v629, 0
        %vm634 = vcmask 1043456
        %v636 = vsel %vm634, %v626, 0
        %638 = vmatprep.subr.mxu0 0.0
        %639 = vmatpush1.msra.mxu0 0.0
        %640 = vmatprep.subr.mxu0 0.0
        %641 = vmatpush1.msra.mxu0 0.0
        %642 = vmatprep.subr.mxu0 0.0
        %643 = vmatpush1.msra.mxu0 0.0
        %644 = vmatprep.subr.mxu0 0.0
        %645 = vmatpush1.msra.mxu0 0.0
        %646 = vmatprep.subr.mxu0 0.0
        %647 = vmatpush1.msra.mxu0 0.0
        %648 = vmatprep.subr.mxu0 0.0
        %649 = vmatpush1.msra.mxu0 0.0
        %650 = vmatprep.subr.mxu0 0.0
        %651 = vmatpush1.msra.mxu0 0.0
        %652 = vmatprep.subr.mxu0 0.0
        %653 = vmatpush1.msra.mxu0 0.0
        %654 = vmatprep.subr.mxu0 0.0
        %655 = vmatpush1.msra.mxu0 0.0
        %656 = vmatprep.subr.mxu0 0.0
        %657 = vmatpush1.msra.mxu0 0.0
        %658 = vmatprep.subr.mxu0 0.0
        %659 = vmatpush1.msra.mxu0 0.0
        %660 = vmatprep.subr.mxu0 0.0
        %661 = vmatpush1.msra.mxu0 0.0
        %662 = vmatprep.subr.mxu0 0.0
        %663 = vmatpush1.msra.mxu0 0.0
        %664 = vmatprep.subr.mxu0 0.0
        %665 = vmatpush1.msra.mxu0 0.0
        %666 = vmatprep.subr.mxu0 0.0
        %667 = vmatpush1.msra.mxu0 0.0
        %668 = vmatprep.subr.mxu0 0.0
        %669 = vmatpush1.msra.mxu0 %v636
        %670 = vmatprep.subr.mxu0 0.0
        %671 = vmatpush2.msra.mxu0 0.0
        %672 = vmatprep.subr.mxu0 0.0
        %673 = vmatpush2.msra.mxu0 0.0
        %674 = vmatprep.subr.mxu0 0.0
        %675 = vmatpush2.msra.mxu0 0.0
        %676 = vmatprep.subr.mxu0 0.0
        %677 = vmatpush2.msra.mxu0 0.0
        %678 = vmatprep.subr.mxu0 0.0
        %679 = vmatpush2.msra.mxu0 0.0
        %680 = vmatprep.subr.mxu0 0.0
        %681 = vmatpush2.msra.mxu0 0.0
        %682 = vmatprep.subr.mxu0 0.0
        %683 = vmatpush2.msra.mxu0 0.0
        %684 = vmatprep.subr.mxu0 0.0
        %685 = vmatpush2.msra.mxu0 0.0
        %686 = vmatprep.subr.mxu0 0.0
        %687 = vmatpush2.msra.mxu0 0.0
        %688 = vmatprep.subr.mxu0 0.0
        %689 = vmatpush2.msra.mxu0 0.0
        %690 = vmatprep.subr.mxu0 0.0
        %691 = vmatpush2.msra.mxu0 0.0
        %692 = vmatprep.subr.mxu0 0.0
        %693 = vmatpush2.msra.mxu0 0.0
        %694 = vmatprep.subr.mxu0 0.0
        %695 = vmatpush2.msra.mxu0 0.0
        %696 = vmatprep.subr.mxu0 0.0
        %697 = vmatpush2.msra.mxu0 0.0
        %698 = vmatprep.subr.mxu0 0.0
        %699 = vmatpush2.msra.mxu0 0.0
        %700 = vmatprep.subr.mxu0 0.0
        %701 = vmatpush2.msra.mxu0 0.0
        %702 = vmatprep.mubr.f32.mxu0 0.0
        %703 = vmatmul.mubr.f32.gmra.mxu0 %v632
        %v704 = vpop.f32.mrf.mxu0
        %v705 = vadd.f32 0.0, %v704
        %v706 = vpop.f32.mrf.mxu0
        %707 = vdwg.mxu0
        %v708 = vmul.f32 %v705, 0.9998
        %710 = vset.pattern.permute.xlu0 0
        %711 = vperm.xlu0 %710, %v708
        %v712 = vpop.permute.xlu0 %711
        %v714 = vmul.f32 %v705, 0.00019996
        %716 = vset.pattern.permute.xlu0 1
        %717 = vperm.xlu0 %716, %v714
        %v718 = vpop.permute.xlu0 %717
        %v720 = vmul.f32 %v718, %v510
        %v721 = vmul.f32 %v718, %v512
        %v722 = vadd.f32 %v712, %v720
        %v723 = vadd.f32 %v712, %v721
        %v724 = vmul.f32 %v510, %v510
        %v725 = vmul.f32 %v512, %v512
        %v726 = vmul.f32 %v705, 1.9996e-08
        %728 = vset.pattern.permute.xlu0 2
        %729 = vperm.xlu0 %728, %v726
        %v730 = vpop.permute.xlu0 %729
        %v732 = vmul.f32 %v730, %v724
        %v733 = vmul.f32 %v730, %v725
        %v734 = vadd.f32 %v722, %v732
        %v735 = vadd.f32 %v723, %v733
        %v736 = vmul.f32 %v724, %v510
        %v737 = vmul.f32 %v725, %v512
        %v738 = vmul.f32 %v705, 1.3330667e-12
        %740 = vset.pattern.permute.xlu0 3
        %741 = vperm.xlu0 %740, %v738
        %v742 = vpop.permute.xlu0 %741
        %v744 = vmul.f32 %v742, %v736
        %v745 = vmul.f32 %v742, %v737
        %v746 = vadd.f32 %v734, %v744
        %v747 = vadd.f32 %v735, %v745
        %v748 = vld [vmem:[%s414] sm:$0xff]
        %v749 = vld [vmem:[%s414 + $0x8] sm:$0xff]
        %v751 = vsel %vm555, %v748, 0
        %v754 = vsel %vm555, %v749, 0
        %756 = vmatprep.subr.mxu0 0.0
        %757 = vmatpush1.msra.mxu0 0.0
        %758 = vmatprep.subr.mxu0 0.0
        %759 = vmatpush1.msra.mxu0 0.0
        %760 = vmatprep.subr.mxu0 0.0
        %761 = vmatpush1.msra.mxu0 0.0
        %762 = vmatprep.subr.mxu0 0.0
        %763 = vmatpush1.msra.mxu0 0.0
        %764 = vmatprep.subr.mxu0 0.0
        %765 = vmatpush1.msra.mxu0 0.0
        %766 = vmatprep.subr.mxu0 0.0
        %767 = vmatpush1.msra.mxu0 0.0
        %768 = vmatprep.subr.mxu0 0.0
        %769 = vmatpush1.msra.mxu0 0.0
        %770 = vmatprep.subr.mxu0 0.0
        %771 = vmatpush1.msra.mxu0 0.0
        %772 = vmatprep.subr.mxu0 0.0
        %773 = vmatpush1.msra.mxu0 0.0
        %774 = vmatprep.subr.mxu0 0.0
        %775 = vmatpush1.msra.mxu0 0.0
        %776 = vmatprep.subr.mxu0 0.0
        %777 = vmatpush1.msra.mxu0 0.0
        %778 = vmatprep.subr.mxu0 0.0
        %779 = vmatpush1.msra.mxu0 0.0
        %780 = vmatprep.subr.mxu0 0.0
        %781 = vmatpush1.msra.mxu0 0.0
        %782 = vmatprep.subr.mxu0 0.0
        %783 = vmatpush1.msra.mxu0 0.0
        %784 = vmatprep.subr.mxu0 0.0
        %785 = vmatpush1.msra.mxu0 0.0
        %786 = vmatprep.subr.mxu0 %v747
        %787 = vmatpush1.msra.mxu0 %v746
        %788 = vmatprep.subr.mxu0 0.0
        %789 = vmatpush2.msra.mxu0 0.0
        %790 = vmatprep.subr.mxu0 0.0
        %791 = vmatpush2.msra.mxu0 0.0
        %792 = vmatprep.subr.mxu0 0.0
        %793 = vmatpush2.msra.mxu0 0.0
        %794 = vmatprep.subr.mxu0 0.0
        %795 = vmatpush2.msra.mxu0 0.0
        %796 = vmatprep.subr.mxu0 0.0
        %797 = vmatpush2.msra.mxu0 0.0
        %798 = vmatprep.subr.mxu0 0.0
        %799 = vmatpush2.msra.mxu0 0.0
        %800 = vmatprep.subr.mxu0 0.0
        %801 = vmatpush2.msra.mxu0 0.0
        %802 = vmatprep.subr.mxu0 0.0
        %803 = vmatpush2.msra.mxu0 0.0
        %804 = vmatprep.subr.mxu0 0.0
        %805 = vmatpush2.msra.mxu0 0.0
        %806 = vmatprep.subr.mxu0 0.0
        %807 = vmatpush2.msra.mxu0 0.0
        %808 = vmatprep.subr.mxu0 0.0
        %809 = vmatpush2.msra.mxu0 0.0
        %810 = vmatprep.subr.mxu0 0.0
        %811 = vmatpush2.msra.mxu0 0.0
        %812 = vmatprep.subr.mxu0 0.0
        %813 = vmatpush2.msra.mxu0 0.0
        %814 = vmatprep.subr.mxu0 0.0
        %815 = vmatpush2.msra.mxu0 0.0
        %816 = vmatprep.subr.mxu0 0.0
        %817 = vmatpush2.msra.mxu0 0.0
        %818 = vmatprep.subr.mxu0 0.0
        %819 = vmatpush2.msra.mxu0 0.0
        %820 = vmatprep.mubr.f32.mxu0 0.0
        %821 = vmatmul.mubr.f32.gmra.mxu0 %v751
        %v822 = vpop.f32.mrf.mxu0
        %v823 = vadd.f32 0.0, %v822
        %v824 = vpop.f32.mrf.mxu0
        %v825 = vadd.f32 0.0, %v824
        %826 = vmatprep.mubr.f32.mxu0 0.0
        %827 = vmatmul.mubr.f32.gmra.mxu0 %v754
        %v828 = vpop.f32.mrf.mxu0
        %v829 = vadd.f32 0.0, %v828
        %v830 = vpop.f32.mrf.mxu0
        %v831 = vadd.f32 0.0, %v830
        %832 = vdwg.mxu0
        %v833 = vadd.f32 %v823, %v825
        %834 = vadd.xlane.f32.xlu0 %v833
        %v835 = vpop.xlane.xlu0 %834
        %v836 = vadd.f32 %v829, %v831
        %837 = vadd.xlane.f32.xlu0 %v836
        %v838 = vpop.xlane.xlu0 %837
        %v839 = vmul.f32 %v823, %v823
        %v840 = vmul.f32 %v825, %v825
        %v841 = vmul.f32 %v829, %v829
        %v842 = vmul.f32 %v831, %v831
        %v843 = vadd.f32 %v839, %v840
        %844 = vadd.xlane.f32.xlu0 %v843
        %v845 = vpop.xlane.xlu0 %844
        %v846 = vadd.f32 %v841, %v842
        %847 = vadd.xlane.f32.xlu0 %v846
        %v848 = vpop.xlane.xlu0 %847
        %v849 = vsel %vm548, %v835, %v845
        %v850 = vsel %vm548, %v838, %v848
        %v851 = vld [vmem:[%s6] sm:$0xf]
        %v853 = vsel %vm433, %v851, 0
        %855 = vmatprep.subr.mxu0 0.0
        %856 = vmatpush1.msra.mxu0 0.0
        %857 = vmatprep.subr.mxu0 0.0
        %858 = vmatpush1.msra.mxu0 0.0
        %859 = vmatprep.subr.mxu0 0.0
        %860 = vmatpush1.msra.mxu0 0.0
        %861 = vmatprep.subr.mxu0 0.0
        %862 = vmatpush1.msra.mxu0 0.0
        %863 = vmatprep.subr.mxu0 0.0
        %864 = vmatpush1.msra.mxu0 0.0
        %865 = vmatprep.subr.mxu0 0.0
        %866 = vmatpush1.msra.mxu0 0.0
        %867 = vmatprep.subr.mxu0 0.0
        %868 = vmatpush1.msra.mxu0 0.0
        %869 = vmatprep.subr.mxu0 0.0
        %870 = vmatpush1.msra.mxu0 0.0
        %871 = vmatprep.subr.mxu0 0.0
        %872 = vmatpush1.msra.mxu0 0.0
        %873 = vmatprep.subr.mxu0 0.0
        %874 = vmatpush1.msra.mxu0 0.0
        %875 = vmatprep.subr.mxu0 0.0
        %876 = vmatpush1.msra.mxu0 0.0
        %877 = vmatprep.subr.mxu0 0.0
        %878 = vmatpush1.msra.mxu0 0.0
        %879 = vmatprep.subr.mxu0 0.0
        %880 = vmatpush1.msra.mxu0 0.0
        %881 = vmatprep.subr.mxu0 0.0
        %882 = vmatpush1.msra.mxu0 0.0
        %883 = vmatprep.subr.mxu0 0.0
        %884 = vmatpush1.msra.mxu0 %v850
        %885 = vmatprep.subr.mxu0 0.0
        %886 = vmatpush1.msra.mxu0 %v849
        %887 = vmatprep.subr.mxu0 0.0
        %888 = vmatpush2.msra.mxu0 0.0
        %889 = vmatprep.subr.mxu0 0.0
        %890 = vmatpush2.msra.mxu0 0.0
        %891 = vmatprep.subr.mxu0 0.0
        %892 = vmatpush2.msra.mxu0 0.0
        %893 = vmatprep.subr.mxu0 0.0
        %894 = vmatpush2.msra.mxu0 0.0
        %895 = vmatprep.subr.mxu0 0.0
        %896 = vmatpush2.msra.mxu0 0.0
        %897 = vmatprep.subr.mxu0 0.0
        %898 = vmatpush2.msra.mxu0 0.0
        %899 = vmatprep.subr.mxu0 0.0
        %900 = vmatpush2.msra.mxu0 0.0
        %901 = vmatprep.subr.mxu0 0.0
        %902 = vmatpush2.msra.mxu0 0.0
        %903 = vmatprep.subr.mxu0 0.0
        %904 = vmatpush2.msra.mxu0 0.0
        %905 = vmatprep.subr.mxu0 0.0
        %906 = vmatpush2.msra.mxu0 0.0
        %907 = vmatprep.subr.mxu0 0.0
        %908 = vmatpush2.msra.mxu0 0.0
        %909 = vmatprep.subr.mxu0 0.0
        %910 = vmatpush2.msra.mxu0 0.0
        %911 = vmatprep.subr.mxu0 0.0
        %912 = vmatpush2.msra.mxu0 0.0
        %913 = vmatprep.subr.mxu0 0.0
        %914 = vmatpush2.msra.mxu0 0.0
        %915 = vmatprep.subr.mxu0 0.0
        %916 = vmatpush2.msra.mxu0 0.0
        %917 = vmatprep.subr.mxu0 0.0
        %918 = vmatpush2.msra.mxu0 0.0
        %919 = vmatprep.mubr.f32.mxu0 0.0
        %920 = vmatmul.mubr.f32.gmra.mxu0 %v853
        %v921 = vpop.f32.mrf.mxu0
        %v922 = vadd.f32 0.0, %v921
        %v923 = vpop.f32.mrf.mxu0
        %924 = vdwg.mxu0
        %v925 = vmul.f32 %v922, 0.0009765625
        %v926 = vmul.f32 %v925, %v925
        %928 = vrot.lane.b32.xlu0 %v926, 1
        %v929 = vpop.permute.xlu0 %928
        %v931 = vsub.f32 %v925, %v929
        %v932 = vmax.f32 %v931, 0.0
        %v933 = vadd.f32 %v932, 1e-05
        %v934 = vrsqrt.pop %v933
        %v935 = vld [vmem:[%s5] sm:$0xff]
        %v936 = vld [vmem:[%s5 + $0x8] sm:$0xff]
        %v937 = vsel %vm548, %v925, %v934
        %v939 = vsel %vm630, %v935, 0
        %v942 = vsel %vm630, %v936, 0
        %v945 = vsel %vm634, %v937, 0
        %947 = vmatprep.subr.mxu0 0.0
        %948 = vmatpush1.msra.mxu0 0.0
        %949 = vmatprep.subr.mxu0 0.0
        %950 = vmatpush1.msra.mxu0 0.0
        %951 = vmatprep.subr.mxu0 0.0
        %952 = vmatpush1.msra.mxu0 0.0
        %953 = vmatprep.subr.mxu0 0.0
        %954 = vmatpush1.msra.mxu0 0.0
        %955 = vmatprep.subr.mxu0 0.0
        %956 = vmatpush1.msra.mxu0 0.0
        %957 = vmatprep.subr.mxu0 0.0
        %958 = vmatpush1.msra.mxu0 0.0
        %959 = vmatprep.subr.mxu0 0.0
        %960 = vmatpush1.msra.mxu0 0.0
        %961 = vmatprep.subr.mxu0 0.0
        %962 = vmatpush1.msra.mxu0 0.0
        %963 = vmatprep.subr.mxu0 0.0
        %964 = vmatpush1.msra.mxu0 0.0
        %965 = vmatprep.subr.mxu0 0.0
        %966 = vmatpush1.msra.mxu0 0.0
        %967 = vmatprep.subr.mxu0 0.0
        %968 = vmatpush1.msra.mxu0 0.0
        %969 = vmatprep.subr.mxu0 0.0
        %970 = vmatpush1.msra.mxu0 0.0
        %971 = vmatprep.subr.mxu0 0.0
        %972 = vmatpush1.msra.mxu0 0.0
        %973 = vmatprep.subr.mxu0 0.0
        %974 = vmatpush1.msra.mxu0 0.0
        %975 = vmatprep.subr.mxu0 0.0
        %976 = vmatpush1.msra.mxu0 0.0
        %977 = vmatprep.subr.mxu0 0.0
        %978 = vmatpush1.msra.mxu0 %v945
        %979 = vmatprep.subr.mxu0 0.0
        %980 = vmatpush2.msra.mxu0 0.0
        %981 = vmatprep.subr.mxu0 0.0
        %982 = vmatpush2.msra.mxu0 0.0
        %983 = vmatprep.subr.mxu0 0.0
        %984 = vmatpush2.msra.mxu0 0.0
        %985 = vmatprep.subr.mxu0 0.0
        %986 = vmatpush2.msra.mxu0 0.0
        %987 = vmatprep.subr.mxu0 0.0
        %988 = vmatpush2.msra.mxu0 0.0
        %989 = vmatprep.subr.mxu0 0.0
        %990 = vmatpush2.msra.mxu0 0.0
        %991 = vmatprep.subr.mxu0 0.0
        %992 = vmatpush2.msra.mxu0 0.0
        %993 = vmatprep.subr.mxu0 0.0
        %994 = vmatpush2.msra.mxu0 0.0
        %995 = vmatprep.subr.mxu0 0.0
        %996 = vmatpush2.msra.mxu0 0.0
        %997 = vmatprep.subr.mxu0 0.0
        %998 = vmatpush2.msra.mxu0 0.0
        %999 = vmatprep.subr.mxu0 0.0
        %1000 = vmatpush2.msra.mxu0 0.0
        %1001 = vmatprep.subr.mxu0 0.0
        %1002 = vmatpush2.msra.mxu0 0.0
        %1003 = vmatprep.subr.mxu0 0.0
        %1004 = vmatpush2.msra.mxu0 0.0
        %1005 = vmatprep.subr.mxu0 0.0
        %1006 = vmatpush2.msra.mxu0 0.0
        %1007 = vmatprep.subr.mxu0 0.0
        %1008 = vmatpush2.msra.mxu0 0.0
        %1009 = vmatprep.subr.mxu0 0.0
        %1010 = vmatpush2.msra.mxu0 0.0
        %1011 = vmatprep.mubr.f32.mxu0 0.0
        %1012 = vmatmul.mubr.f32.gmra.mxu0 %v939
        %v1013 = vpop.f32.mrf.mxu0
        %v1014 = vadd.f32 0.0, %v1013
        %v1015 = vpop.f32.mrf.mxu0
        %1016 = vmatprep.mubr.f32.mxu0 0.0
        %1017 = vmatmul.mubr.f32.gmra.mxu0 %v942
        %v1018 = vpop.f32.mrf.mxu0
        %v1019 = vadd.f32 0.0, %v1018
        %v1020 = vpop.f32.mrf.mxu0
        %1021 = vdwg.mxu0
        %v1022 = vld [vmem:[%s419] sm:$0xff]
        %v1023 = vld [vmem:[%s419 + $0x8] sm:$0xff]
        %1026 = vrot.lane.b32.xlu0 %v1022, 1
        %v1027 = vpop.permute.xlu0 %1026
        %1028 = vrot.lane.b32.xlu0 %v1023, 1
        %v1029 = vpop.permute.xlu0 %1028
        %v1032 = vmul.f32 %v1014, %v1027
        %v1033 = vmul.f32 %v1019, %v1029
        %v1034 = vld [vmem:[%s424] sm:$0xff]
        %v1035 = vld [vmem:[%s424 + $0x8] sm:$0xff]
        %1038 = vrot.lane.b32.xlu0 %v1032, 127
        %v1039 = vpop.permute.xlu0 %1038
        %1040 = vrot.lane.b32.xlu0 %v1033, 127
        %v1041 = vpop.permute.xlu0 %1040
        %v1044 = vmul.f32 %v1014, %v1039
        %v1045 = vmul.f32 %v1019, %v1041
        %v1046 = vsub.f32 %v1034, %v1044
        %v1047 = vsub.f32 %v1035, %v1045
        %1048 = vset.pattern.permute.xlu0 1
        %1049 = vperm.xlu0 %1048, %v1032
        %v1050 = vpop.permute.xlu0 %1049
        %1052 = vset.pattern.permute.xlu0 1
        %1053 = vperm.xlu0 %1052, %v1033
        %v1054 = vpop.permute.xlu0 %1053
        %v1056 = vmul.f32 %v823, %v1050
        %v1057 = vmul.f32 %v825, %v1050
        %v1058 = vmul.f32 %v829, %v1054
        %v1059 = vmul.f32 %v831, %v1054
        %1061 = vset.pattern.permute.xlu0 0
        %1062 = vperm.xlu0 %1061, %v1046
        %v1063 = vpop.permute.xlu0 %1062
        %1066 = vset.pattern.permute.xlu0 0
        %1067 = vperm.xlu0 %1066, %v1047
        %v1068 = vpop.permute.xlu0 %1067
        %v1070 = vadd.f32 %v1056, %v1063
        %v1071 = vadd.f32 %v1057, %v1063
        %v1072 = vadd.f32 %v1058, %v1068
        %v1073 = vadd.f32 %v1059, %v1068
        %v1074 = vadd.f32 %v1070, %v426
        %v1075 = vadd.f32 %v1071, %v427
        %v1076 = vadd.f32 %v1072, %v428
        %v1077 = vadd.f32 %v1073, %v429
        %1078 = vst [vmem:[%s399] sm:$0xff] %v1074
        %1079 = vst [vmem:[%s399 + $0x8] sm:$0xff] %v1075
        %1080 = vst [vmem:[%s399 + $0x10] sm:$0xff] %v1076
        %1081 = vst [vmem:[%s399 + $0x18] sm:$0xff] %v1077
        %s1082 = sand.u32 %s259, 1
        %s1083 = scalar_lea.sflag [#allocation3], %s1082
        %s1084 = sand.u32 %s259, 1
        %s1085 = smul.addr %s1084, 32
        %s1086 = scalar_lea.vmem [#allocation2], %s1085
        // Predicated region
        $region57: #{tpu_custom_call.1} parent=55 // pred_check
          %p1087 = pneg %p269
        $region58: #{tpu_custom_call.1} parent=55 // pred_check_branch
          %1089 = sbr.rel (%p1087) target = $region60
        $region59: #{tpu_custom_call.1} parent=55 // pred_region
          %s1090 = smul.u32 2, %s28
          %s1092 = ssub.s32 512, 512
          %1093 = vsyncadd %s1083, %s1092
          %s1094 = smul.addr %s1090, 2
          %s1095 = smul.addr %s27, 4
          %s1096 = sadd.s32 %s1094, %s1095
          %s1097 = smul.addr %s1096, 128
          %s1098 = scalar_lea.hbm %s9, %s1097
          %s1099 = sshll.u32 %s1086, 4
          %s1100 = int_to_ptr.vmem [resolvable:$true] %s1099
          %1105 = dma.vmem_to_hbm [thread:$0]  %s1100, 512, %s1098, %s1083, 256, 256, 16
        $region60: #{tpu_custom_call.1} parent=55 // pred_fallthru
          _
      $region56: #{tpu_custom_call.1} parent=5 // pred_fallthru
        _
      %p1106 = scmp.le.s32.totalorder 2, %s18
      // Predicated region
      $region61: #{tpu_custom_call.1} parent=5 // pred_check
        %p1107 = pneg %p1106
      $region62: #{tpu_custom_call.1} parent=5 // pred_check_branch
        %1109 = sbr.rel (%p1107) target = $region64
      $region63: #{tpu_custom_call.1} parent=5 // pred_region
        %s1110 = ssub.s32 %s18, 2
        // Predicated region
        $region65: #{tpu_custom_call.1} parent=63 // pred_check
          %p1111 = pneg %p275
        $region66: #{tpu_custom_call.1} parent=63 // pred_check_branch
          %1113 = sbr.rel (%p1111) target = $region68
        $region67: #{tpu_custom_call.1} parent=63 // pred_region
          %s1114 = sand.u32 %s260, 1
          %s1115 = scalar_lea.sflag [#allocation3], %s1114
          %s1116 = sand.u32 %s260, 1
          %s1117 = smul.addr %s1116, 32
          %s1118 = scalar_lea.vmem [#allocation2], %s1117
          %1119 = dma.done %s1115, 512
        $region68: #{tpu_custom_call.1} parent=63 // pred_fallthru
          _
      $region64: #{tpu_custom_call.1} parent=5 // pred_fallthru
        _
    $region6: #{tpu_custom_call.1} parent=1 // loop_footer
      %s22 = sadd.s32 1, %s18
    $region7: #{tpu_custom_call.1} parent=1 // loop_footer_branch
      %17 = sbr.rel target = $region3
    $region8: #{tpu_custom_call.1} parent=1 // loop_exit
      _
    %1120 = vsyncpa [#allocation3], 1
    %s1121 = scalar_lea.sflag [#allocation3], 1
    %1122 = vsyncpa %s1121, 1

</llo_original>
